<compile_context>
chip_gen: v7x
topology: tpu7x:2x2x1
jax: 0.10.0
libtpu: 0.0.40
codegen_flags: <defaults>
</compile_context>

<pallas_src>
import functools

import jax
import jax.numpy as jnp
import numpy as np
from jax.experimental import pallas as pl
from jax.experimental.pallas import tpu as pltpu


def lstm_chunk_kernel(x_ref, h0_ref, c0_ref, w_ih_ref, w_hh_ref, b_ref,
                      w_lin_ref, b_lin_ref, out_ref,
                      h_sc, c_sc, xg_sc, hist_sc,
                      *, chunk_T, batch_tile, hidden, gate_stride, unroll):
    """One grid step == `chunk_T` timesteps of the LSTM + one batched Linear head.

    Grid is (num_batch_blocks, num_chunks); pl.program_id(1) is the chunk index.

    x_ref     : (chunk_T*Bt, I)      chunk of inputs, rows ordered (t, b-within-block)
    h0_ref    : (Bt, H)              initial hidden state for this batch block
    c0_ref    : (Bt, H)              initial cell state for this batch block
    w_ih_ref  : (I, 4*Hp)            input->gates weights, gate order (i,f,o,g),
                                     gate k at cols [k*Hp, k*Hp+H)
    w_hh_ref  : (H, 4*Hp)            hidden->gates weights, same packing
    b_ref     : (1, 4*Hp)            b_ih + b_hh, same packing
    w_lin_ref : (H, Op)              Linear head weight (transposed, lane-padded)
    b_lin_ref : (1, Op)              Linear head bias (lane-padded)
    out_ref   : (chunk_T*Bt, Op)     linear(h_t) for every timestep of the chunk
    h_sc,c_sc : (Bt, H) f32          recurrent state carried across chunks
    xg_sc     : (chunk_T*Bt, 4*Hp)   hoisted input projection for the chunk
    hist_sc   : (chunk_T*Bt, H) f32  per-chunk hidden-state history for the deferred head
    """
    chunk = pl.program_id(1)
    Bt, H, Hp = batch_tile, hidden, gate_stride

    @pl.when(chunk == 0)
    def _init():
        h_sc[...] = h0_ref[...].astype(jnp.float32)
        c_sc[...] = c0_ref[...].astype(jnp.float32)

    # Hoisted: input projection + bias for every timestep of the chunk, one MXU call.
    xg_sc[...] = (jnp.dot(x_ref[...].astype(jnp.float32), w_ih_ref[...],
                          preferred_element_type=jnp.float32)
                  + b_ref[...])                              # (chunk_T*Bt, 4*Hp)

    w_hh = w_hh_ref[...]

    def step(t, carry):
        h, c = carry
        if isinstance(t, int):
            row0 = t * Bt                       # static, Bt % 8 == 0 -> 8-aligned
        else:
            row0 = pl.multiple_of(t * Bt, 8)    # dynamic, hint 8-sublane alignment
        # Only h @ W_hh + elementwise work on the serial path.
        gates = xg_sc[pl.ds(row0, Bt), :] + jnp.dot(
            h, w_hh, preferred_element_type=jnp.float32)     # (Bt, 4*Hp)
        # Gates packed (i, f, o, g): one wide sigmoid over the contiguous i|f|o slab,
        # one tanh over the g stripe. Padded lanes are computed but never read.
        sig = jax.nn.sigmoid(gates[:, :3 * Hp])
        i_g = sig[:, 0 * Hp:0 * Hp + H]
        f_g = sig[:, 1 * Hp:1 * Hp + H]
        o_g = sig[:, 2 * Hp:2 * Hp + H]
        g_g = jnp.tanh(gates[:, 3 * Hp:3 * Hp + H])
        c = f_g * c + i_g * g_g
        h = o_g * jnp.tanh(c)
        hist_sc[pl.ds(row0, Bt), :] = h         # 8-aligned store, off the serial path
        return h, c

    carry = (h_sc[...], c_sc[...])
    if unroll >= chunk_T:
        # Small chunks: full static unroll (max LLO scheduling visibility).
        for t in range(chunk_T):
            carry = step(t, carry)
        h, c = carry
    else:
        # Large chunks: bounded live ranges, partial unroll.
        h, c = jax.lax.fori_loop(0, chunk_T, step, carry, unroll=unroll)

    h_sc[...] = h
    c_sc[...] = c

    # Deferred Linear head: one batched matmul + one lane-dense (unmasked) store per chunk.
    y = (jnp.dot(hist_sc[...], w_lin_ref[...], preferred_element_type=jnp.float32)
         + b_lin_ref[...])                                   # (chunk_T*Bt, Op)
    out_ref[...] = y.astype(out_ref.dtype)


def _pack_gates(w, H, Hp):
    """(rows, 4*H) in PyTorch gate order (i,f,g,o) -> (rows, 4*Hp) in order (i,f,o,g),
    gate k at cols [k*Hp, k*Hp+H). Padded columns are zero and never read; this buys
    lane-aligned gate stripes and a contiguous sigmoid (i,f,o) slab."""
    rows = w.shape[0]
    w4 = w.reshape(rows, 4, H)
    w4 = w4[:, jnp.array([0, 1, 3, 2]), :]          # (i,f,g,o) -> (i,f,o,g)
    out = jnp.zeros((rows, 4, Hp), w.dtype).at[:, :, :H].set(w4)
    return out.reshape(rows, 4 * Hp)


def _choose_chunk_T(T, Bt, I, H, Hp, Op, budget_bytes):
    """Largest chunk_T dividing T whose per-chunk VMEM residents fit the budget."""
    def resident_bytes(ct):
        rows = ct * Bt
        x_buf = 2 * rows * I * 4                    # double-buffered x chunk
        out_buf = 2 * rows * Op * 4                 # double-buffered out chunk
        xg = rows * 4 * Hp * 4                      # xg scratch (f32)
        hist = rows * H * 4                         # hidden history scratch (f32)
        weights = (I + H) * 4 * Hp * 4 + H * Op * 4 + (4 * Hp + Op) * 4  # single-buffered
        state = 2 * Bt * H * 4
        return x_buf + out_buf + xg + hist + weights + state

    best = 1
    for ct in range(1, T + 1):
        if T % ct == 0 and resident_bytes(ct) <= budget_bytes:
            best = ct
    return best


@functools.partial(jax.jit, static_argnames=("chunk_T", "num_batch_blocks", "unroll",
                                              "vmem_limit_bytes"))
def lstm_layers_forward(x, h0, c0, w_ih_t, w_hh_t, b, w_lin_t, b_lin, *,
                        chunk_T=None, num_batch_blocks=1, unroll=8,
                        vmem_limit_bytes=48 * 1024 * 1024):
    """x: (T, B, I); h0/c0: (1, B, H)  ->  (T, B, O).

    num_batch_blocks: set to 2 on v7x (2 TensorCores) when the padded batch allows two
    8-row blocks; keep 1 on v5e/v6e (splitting the batch on a single TC just doubles the
    serial recurrence length).
    """
    T, B, I = x.shape
    H = w_hh_t.shape[0]
    O = w_lin_t.shape[1]

    nb = num_batch_blocks
    # Batch tile: multiple of 8 sublanes so every per-timestep slice is tile-aligned.
    Bp0 = ((B + 7) // 8) * 8
    Bt = (((Bp0 + nb - 1) // nb + 7) // 8) * 8
    Bp = Bt * nb

    Hp = ((H + 127) // 128) * 128       # lane-aligned per-gate stride
    Op = ((O + 127) // 128) * 128       # lane-dense head output width

    if chunk_T is None:
        chunk_T = _choose_chunk_T(T, Bt, I, H, Hp, Op,
                                  budget_bytes=int(vmem_limit_bytes * 0.7))
    assert T % chunk_T == 0
    num_chunks = T // chunk_T
    # Full static unroll only for short chunks; otherwise partial-unrolled fori_loop.
    unroll_steps = chunk_T if chunk_T <= 16 else max(1, min(unroll, chunk_T))

    # --- Gate-packed / lane-padded parameters (padded lanes are zero, never read) ---
    w_ih_p = _pack_gates(w_ih_t, H, Hp)
    w_hh_p = _pack_gates(w_hh_t, H, Hp)
    b_p = _pack_gates(b, H, Hp)
    w_lin_p = jnp.zeros((H, Op), w_lin_t.dtype).at[:, :O].set(w_lin_t)
    b_lin_p = jnp.zeros((1, Op), b_lin.dtype).at[:, :O].set(b_lin)

    # --- Batch padding + row layout (batch_block, t, b_within_block) ---
    x_pad = jnp.zeros((T, Bp, I), x.dtype).at[:, :B, :].set(x)
    x_rows = (x_pad.reshape(T, nb, Bt, I).transpose(1, 0, 2, 3)
              .reshape(nb * T * Bt, I))
    h0_p = jnp.zeros((Bp, H), h0.dtype).at[:B, :].set(h0.reshape(B, H))
    c0_p = jnp.zeros((Bp, H), c0.dtype).at[:B, :].set(c0.reshape(B, H))

    kernel = functools.partial(lstm_chunk_kernel, chunk_T=chunk_T, batch_tile=Bt,
                               hidden=H, gate_stride=Hp, unroll=unroll_steps)

    single = dict(pipeline_mode=pl.Buffered(1))   # grid-invariant operands: 1 buffer

    grid_spec = pltpu.PrefetchScalarGridSpec(
        num_scalar_prefetch=0,
        grid=(nb, num_chunks),
        in_specs=[
            pl.BlockSpec((chunk_T * Bt, I),
                         lambda bb, c: (bb * num_chunks + c, 0)),          # x chunk
            pl.BlockSpec((Bt, H), lambda bb, c: (bb, 0), **single),        # h0
            pl.BlockSpec((Bt, H), lambda bb, c: (bb, 0), **single),        # c0
            pl.BlockSpec((I, 4 * Hp), lambda bb, c: (0, 0), **single),     # w_ih
            pl.BlockSpec((H, 4 * Hp), lambda bb, c: (0, 0), **single),     # w_hh
            pl.BlockSpec((1, 4 * Hp), lambda bb, c: (0, 0), **single),     # bias
            pl.BlockSpec((H, Op), lambda bb, c: (0, 0), **single),         # w_lin
            pl.BlockSpec((1, Op), lambda bb, c: (0, 0), **single),         # b_lin
        ],
        out_specs=pl.BlockSpec((chunk_T * Bt, Op),
                               lambda bb, c: (bb * num_chunks + c, 0)),
        scratch_shapes=[
            pltpu.VMEM((Bt, H), jnp.float32),                    # h state (carried)
            pltpu.VMEM((Bt, H), jnp.float32),                    # c state (carried)
            pltpu.VMEM((chunk_T * Bt, 4 * Hp), jnp.float32),     # hoisted x-projection
            pltpu.VMEM((chunk_T * Bt, H), jnp.float32),          # per-chunk h history
        ],
    )

    out_rows = pl.pallas_call(
        kernel,
        out_shape=jax.ShapeDtypeStruct((nb * T * Bt, Op), x.dtype),
        grid_spec=grid_spec,
        compiler_params=pltpu.CompilerParams(
            # batch blocks independent (shardable across TCs); time chunks sequential.
            dimension_semantics=("parallel", "arbitrary"),
            vmem_limit_bytes=vmem_limit_bytes,
        ),
    )(x_rows, h0_p, c0_p, w_ih_p, w_hh_p, b_p, w_lin_p, b_lin_p)

    out = (out_rows.reshape(nb, T, Bt, Op).transpose(1, 0, 2, 3)
           .reshape(T, Bp, Op)[:, :B, :O])
    return out


def reference_forward(x, h0, c0, w_ih_t, w_hh_t, b, w_lin_t, b_lin):
    """Pure-JAX reference replicating torch.nn.LSTM (1 layer) + nn.Linear."""
    T, B, I = x.shape
    H = w_hh_t.shape[0]
    h = h0.reshape(B, H).astype(jnp.float32)
    c = c0.reshape(B, H).astype(jnp.float32)

    def step(carry, x_t):
        h, c = carry
        gates = x_t @ w_ih_t + h @ w_hh_t + b[0]
        i_g = jax.nn.sigmoid(gates[:, 0 * H:1 * H])
        f_g = jax.nn.sigmoid(gates[:, 1 * H:2 * H])
        g_g = jnp.tanh(gates[:, 2 * H:3 * H])
        o_g = jax.nn.sigmoid(gates[:, 3 * H:4 * H])
        c_new = f_g * c + i_g * g_g
        h_new = o_g * jnp.tanh(c_new)
        return (h_new, c_new), h_new

    (_, _), hs = jax.lax.scan(step, (h, c), x.astype(jnp.float32))
    return hs @ w_lin_t + b_lin[0]


if __name__ == "__main__":
    # Small shapes consistent with the module's forward:
    #   input_seq: (seq_len=8, batch=2, input_size=4), hidden_size=32, output_size=1
    T, B, I, H, O = 8, 2, 4, 32, 1

    key = jax.random.PRNGKey(0)
    kx, kh, kc, k1, k2, k3, k4, k5, k6 = jax.random.split(key, 9)

    # Deterministic parameter init (matches PyTorch's U(-1/sqrt(H), 1/sqrt(H)) scheme).
    bound = 1.0 / np.sqrt(H)
    # PyTorch stores W_ih:(4H, I), W_hh:(4H, H); we pass them transposed (gate order i,f,g,o).
    w_ih_t = jax.random.uniform(k1, (I, 4 * H), jnp.float32, -bound, bound)
    w_hh_t = jax.random.uniform(k2, (H, 4 * H), jnp.float32, -bound, bound)
    b_ih = jax.random.uniform(k3, (4 * H,), jnp.float32, -bound, bound)
    b_hh = jax.random.uniform(k4, (4 * H,), jnp.float32, -bound, bound)
    b = (b_ih + b_hh).reshape(1, 4 * H)
    # Linear: PyTorch weight (O, H*num_dirs) -> pass transposed (H, O).
    lin_bound = 1.0 / np.sqrt(H)
    w_lin_t = jax.random.uniform(k5, (H, O), jnp.float32, -lin_bound, lin_bound)
    b_lin = jax.random.uniform(k6, (1, O), jnp.float32, -lin_bound, lin_bound)

    # Inputs: time-major sequence + (h0, c0) state, as in the PyTorch forward.
    x = jax.random.normal(kx, (T, B, I), jnp.float32)
    h0 = 0.1 * jax.random.normal(kh, (1, B, H), jnp.float32)
    c0 = 0.1 * jax.random.normal(kc, (1, B, H), jnp.float32)

    ref = reference_forward(x, h0, c0, w_ih_t, w_hh_t, b, w_lin_t, b_lin)

    # Default path: whole sequence in one chunk, one batch block.
    out = lstm_layers_forward(x, h0, c0, w_ih_t, w_hh_t, b, w_lin_t, b_lin)
    out = jax.block_until_ready(out)
    np.testing.assert_allclose(np.asarray(out), np.asarray(ref), rtol=1e-5, atol=1e-5)
    assert out.shape == (T, B, O)

    # Exercise carried state across chunks and the parallel batch-block axis.
    out2 = lstm_layers_forward(x, h0, c0, w_ih_t, w_hh_t, b, w_lin_t, b_lin,
                               chunk_T=4, num_batch_blocks=2)
    out2 = jax.block_until_ready(out2)
    np.testing.assert_allclose(np.asarray(out2), np.asarray(ref), rtol=1e-5, atol=1e-5)

    print("KERNEL_OK")
</pallas_src>

<mosaic_0001>
module attributes {stable_mosaic.version = 11 : i64} {
  func.func @lstm_chunk_kernel(%arg0: i32, %arg1: i32, %arg2: memref<64x4xf32, #tpu.memory_space<vmem>>, %arg3: memref<8x32xf32, #tpu.memory_space<vmem>>, %arg4: memref<8x32xf32, #tpu.memory_space<vmem>>, %arg5: memref<4x512xf32, #tpu.memory_space<vmem>>, %arg6: memref<32x512xf32, #tpu.memory_space<vmem>>, %arg7: memref<1x512xf32, #tpu.memory_space<vmem>>, %arg8: memref<32x128xf32, #tpu.memory_space<vmem>>, %arg9: memref<1x128xf32, #tpu.memory_space<vmem>>, %arg10: memref<64x128xf32, #tpu.memory_space<vmem>>, %arg11: memref<8x32xf32, #tpu.memory_space<vmem>>, %arg12: memref<8x32xf32, #tpu.memory_space<vmem>>, %arg13: memref<64x512xf32, #tpu.memory_space<vmem>>, %arg14: memref<64x32xf32, #tpu.memory_space<vmem>>) attributes {dimension_semantics = [#tpu.dimension_semantics<parallel>, #tpu.dimension_semantics<arbitrary>], iteration_bounds = array<i64: 1, 1>, scalar_prefetch = 0 : i64, scratch_operands = 4 : i64, tpu.core_type = #tpu.core_type<tc>, window_params = [{transform_indices = @transform_0, window_bounds = array<i64: 64, 4>}, {pipeline_mode = #tpu.pipeline_mode<synchronous>, transform_indices = @transform_1, window_bounds = array<i64: 8, 32>}, {pipeline_mode = #tpu.pipeline_mode<synchronous>, transform_indices = @transform_2, window_bounds = array<i64: 8, 32>}, {pipeline_mode = #tpu.pipeline_mode<synchronous>, transform_indices = @transform_3, window_bounds = array<i64: 4, 512>}, {pipeline_mode = #tpu.pipeline_mode<synchronous>, transform_indices = @transform_4, window_bounds = array<i64: 32, 512>}, {pipeline_mode = #tpu.pipeline_mode<synchronous>, transform_indices = @transform_5, window_bounds = array<i64: 1, 512>}, {pipeline_mode = #tpu.pipeline_mode<synchronous>, transform_indices = @transform_6, window_bounds = array<i64: 32, 128>}, {pipeline_mode = #tpu.pipeline_mode<synchronous>, transform_indices = @transform_7, window_bounds = array<i64: 1, 128>}, {transform_indices = @transform_8, window_bounds = array<i64: 64, 128>}]} {
    %c0_i32 = arith.constant 0 : i32
    %0 = arith.cmpi eq, %arg1, %c0_i32 : i32
    %1 = arith.extui %0 : i1 to i32
    %c0_i32_0 = arith.constant 0 : i32
    %2 = arith.cmpi ne, %1, %c0_i32_0 : i32
    scf.if %2 {
      %c0_68 = arith.constant 0 : index
      %c0_69 = arith.constant 0 : index
      %182 = vector.load %arg3[%c0_68, %c0_69] : memref<8x32xf32, #tpu.memory_space<vmem>>, vector<8x32xf32>
      %c0_70 = arith.constant 0 : index
      %c0_71 = arith.constant 0 : index
      %183 = vector.load %arg11[%c0_70, %c0_71] : memref<8x32xf32, #tpu.memory_space<vmem>>, vector<8x32xf32>
      tpu.vector_store %arg11[%c0_70, %c0_71], %182 {strides = array<i32>} : memref<8x32xf32, #tpu.memory_space<vmem>>, vector<8x32xf32>,
      %c0_72 = arith.constant 0 : index
      %c0_73 = arith.constant 0 : index
      %184 = vector.load %arg4[%c0_72, %c0_73] : memref<8x32xf32, #tpu.memory_space<vmem>>, vector<8x32xf32>
      %c0_74 = arith.constant 0 : index
      %c0_75 = arith.constant 0 : index
      %185 = vector.load %arg12[%c0_74, %c0_75] : memref<8x32xf32, #tpu.memory_space<vmem>>, vector<8x32xf32>
      tpu.vector_store %arg12[%c0_74, %c0_75], %184 {strides = array<i32>} : memref<8x32xf32, #tpu.memory_space<vmem>>, vector<8x32xf32>,
    } else {
    }
    %c0 = arith.constant 0 : index
    %c0_1 = arith.constant 0 : index
    %3 = vector.load %arg2[%c0, %c0_1] : memref<64x4xf32, #tpu.memory_space<vmem>>, vector<64x4xf32>
    %c0_2 = arith.constant 0 : index
    %c0_3 = arith.constant 0 : index
    %4 = vector.load %arg5[%c0_2, %c0_3] : memref<4x512xf32, #tpu.memory_space<vmem>>, vector<4x512xf32>
    %cst = arith.constant dense<0.000000e+00> : vector<64x512xf32>
    %5 = tpu.matmul %3, %4, %cst {dimension_numbers = #tpu.dot_dimension_numbers<[1], [0], [0], [1], [0, 0, 1, 1], [], []>} : vector<64x4xf32>, vector<4x512xf32>, vector<64x512xf32> -> vector<64x512xf32>
    %c0_4 = arith.constant 0 : index
    %c0_5 = arith.constant 0 : index
    %6 = vector.load %arg7[%c0_4, %c0_5] : memref<1x512xf32, #tpu.memory_space<vmem>>, vector<1x512xf32>
    %7 = vector.broadcast %6 : vector<1x512xf32> to vector<64x512xf32>
    %8 = arith.addf %5, %7 : vector<64x512xf32>
    %c0_6 = arith.constant 0 : index
    %c0_7 = arith.constant 0 : index
    %9 = vector.load %arg13[%c0_6, %c0_7] : memref<64x512xf32, #tpu.memory_space<vmem>>, vector<64x512xf32>
    tpu.vector_store %arg13[%c0_6, %c0_7], %8 {strides = array<i32>} : memref<64x512xf32, #tpu.memory_space<vmem>>, vector<64x512xf32>,
    %c0_8 = arith.constant 0 : index
    %c0_9 = arith.constant 0 : index
    %10 = vector.load %arg6[%c0_8, %c0_9] : memref<32x512xf32, #tpu.memory_space<vmem>>, vector<32x512xf32>
    %c0_10 = arith.constant 0 : index
    %c0_11 = arith.constant 0 : index
    %11 = vector.load %arg11[%c0_10, %c0_11] : memref<8x32xf32, #tpu.memory_space<vmem>>, vector<8x32xf32>
    %c0_12 = arith.constant 0 : index
    %c0_13 = arith.constant 0 : index
    %12 = vector.load %arg12[%c0_12, %c0_13] : memref<8x32xf32, #tpu.memory_space<vmem>>, vector<8x32xf32>
    %c0_14 = arith.constant 0 : index
    %c0_15 = arith.constant 0 : index
    %13 = vector.load %arg13[%c0_14, %c0_15] : memref<64x512xf32, #tpu.memory_space<vmem>>, vector<8x512xf32>
    %cst_16 = arith.constant dense<0.000000e+00> : vector<8x512xf32>
    %14 = tpu.matmul %11, %10, %cst_16 {dimension_numbers = #tpu.dot_dimension_numbers<[1], [0], [0], [1], [0, 0, 1, 1], [], []>} : vector<8x32xf32>, vector<32x512xf32>, vector<8x512xf32> -> vector<8x512xf32>
    %15 = arith.addf %13, %14 : vector<8x512xf32>
    %16 = vector.extract_strided_slice %15 {offsets = [0, 0], sizes = [8, 384], strides = [1, 1]} : vector<8x512xf32> to vector<8x384xf32>
    %17 = arith.negf %16 : vector<8x384xf32>
    %18 = math.exp %17 : vector<8x384xf32>
    %cst_17 = arith.constant 1.000000e+00 : f32
    %19 = vector.broadcast %cst_17 : f32 to vector<8x384xf32>
    %20 = arith.addf %19, %18 : vector<8x384xf32>
    %21 = arith.divf %19, %20 : vector<8x384xf32>
    %22 = vector.extract_strided_slice %21 {offsets = [0, 0], sizes = [8, 32], strides = [1, 1]} : vector<8x384xf32> to vector<8x32xf32>
    %23 = vector.extract_strided_slice %21 {offsets = [0, 128], sizes = [8, 32], strides = [1, 1]} : vector<8x384xf32> to vector<8x32xf32>
    %24 = vector.extract_strided_slice %21 {offsets = [0, 256], sizes = [8, 32], strides = [1, 1]} : vector<8x384xf32> to vector<8x32xf32>
    %25 = vector.extract_strided_slice %15 {offsets = [0, 384], sizes = [8, 32], strides = [1, 1]} : vector<8x512xf32> to vector<8x32xf32>
    %26 = math.tanh %25 : vector<8x32xf32>
    %27 = arith.mulf %23, %12 : vector<8x32xf32>
    %28 = arith.mulf %22, %26 : vector<8x32xf32>
    %29 = arith.addf %27, %28 : vector<8x32xf32>
    %30 = math.tanh %29 : vector<8x32xf32>
    %31 = arith.mulf %24, %30 : vector<8x32xf32>
    %c0_18 = arith.constant 0 : index
    %c0_19 = arith.constant 0 : index
    %32 = vector.load %arg14[%c0_18, %c0_19] : memref<64x32xf32, #tpu.memory_space<vmem>>, vector<8x32xf32>
    tpu.vector_store %arg14[%c0_18, %c0_19], %31 {strides = array<i32>} : memref<64x32xf32, #tpu.memory_space<vmem>>, vector<8x32xf32>,
    %c8 = arith.constant 8 : index
    %c0_20 = arith.constant 0 : index
    %33 = vector.load %arg13[%c8, %c0_20] : memref<64x512xf32, #tpu.memory_space<vmem>>, vector<8x512xf32>
    %cst_21 = arith.constant dense<0.000000e+00> : vector<8x512xf32>
    %34 = tpu.matmul %31, %10, %cst_21 {dimension_numbers = #tpu.dot_dimension_numbers<[1], [0], [0], [1], [0, 0, 1, 1], [], []>} : vector<8x32xf32>, vector<32x512xf32>, vector<8x512xf32> -> vector<8x512xf32>
    %35 = arith.addf %33, %34 : vector<8x512xf32>
    %36 = vector.extract_strided_slice %35 {offsets = [0, 0], sizes = [8, 384], strides = [1, 1]} : vector<8x512xf32> to vector<8x384xf32>
    %37 = arith.negf %36 : vector<8x384xf32>
    %38 = math.exp %37 : vector<8x384xf32>
    %cst_22 = arith.constant 1.000000e+00 : f32
    %39 = vector.broadcast %cst_22 : f32 to vector<8x384xf32>
    %40 = arith.addf %39, %38 : vector<8x384xf32>
    %41 = arith.divf %39, %40 : vector<8x384xf32>
    %42 = vector.extract_strided_slice %41 {offsets = [0, 0], sizes = [8, 32], strides = [1, 1]} : vector<8x384xf32> to vector<8x32xf32>
    %43 = vector.extract_strided_slice %41 {offsets = [0, 128], sizes = [8, 32], strides = [1, 1]} : vector<8x384xf32> to vector<8x32xf32>
    %44 = vector.extract_strided_slice %41 {offsets = [0, 256], sizes = [8, 32], strides = [1, 1]} : vector<8x384xf32> to vector<8x32xf32>
    %45 = vector.extract_strided_slice %35 {offsets = [0, 384], sizes = [8, 32], strides = [1, 1]} : vector<8x512xf32> to vector<8x32xf32>
    %46 = math.tanh %45 : vector<8x32xf32>
    %47 = arith.mulf %43, %29 : vector<8x32xf32>
    %48 = arith.mulf %42, %46 : vector<8x32xf32>
    %49 = arith.addf %47, %48 : vector<8x32xf32>
    %50 = math.tanh %49 : vector<8x32xf32>
    %51 = arith.mulf %44, %50 : vector<8x32xf32>
    %c8_23 = arith.constant 8 : index
    %c0_24 = arith.constant 0 : index
    %52 = vector.load %arg14[%c8_23, %c0_24] : memref<64x32xf32, #tpu.memory_space<vmem>>, vector<8x32xf32>
    tpu.vector_store %arg14[%c8_23, %c0_24], %51 {strides = array<i32>} : memref<64x32xf32, #tpu.memory_space<vmem>>, vector<8x32xf32>,
    %c16 = arith.constant 16 : index
    %c0_25 = arith.constant 0 : index
    %53 = vector.load %arg13[%c16, %c0_25] : memref<64x512xf32, #tpu.memory_space<vmem>>, vector<8x512xf32>
    %cst_26 = arith.constant dense<0.000000e+00> : vector<8x512xf32>
    %54 = tpu.matmul %51, %10, %cst_26 {dimension_numbers = #tpu.dot_dimension_numbers<[1], [0], [0], [1], [0, 0, 1, 1], [], []>} : vector<8x32xf32>, vector<32x512xf32>, vector<8x512xf32> -> vector<8x512xf32>
    %55 = arith.addf %53, %54 : vector<8x512xf32>
    %56 = vector.extract_strided_slice %55 {offsets = [0, 0], sizes = [8, 384], strides = [1, 1]} : vector<8x512xf32> to vector<8x384xf32>
    %57 = arith.negf %56 : vector<8x384xf32>
    %58 = math.exp %57 : vector<8x384xf32>
    %cst_27 = arith.constant 1.000000e+00 : f32
    %59 = vector.broadcast %cst_27 : f32 to vector<8x384xf32>
    %60 = arith.addf %59, %58 : vector<8x384xf32>
    %61 = arith.divf %59, %60 : vector<8x384xf32>
    %62 = vector.extract_strided_slice %61 {offsets = [0, 0], sizes = [8, 32], strides = [1, 1]} : vector<8x384xf32> to vector<8x32xf32>
    %63 = vector.extract_strided_slice %61 {offsets = [0, 128], sizes = [8, 32], strides = [1, 1]} : vector<8x384xf32> to vector<8x32xf32>
    %64 = vector.extract_strided_slice %61 {offsets = [0, 256], sizes = [8, 32], strides = [1, 1]} : vector<8x384xf32> to vector<8x32xf32>
    %65 = vector.extract_strided_slice %55 {offsets = [0, 384], sizes = [8, 32], strides = [1, 1]} : vector<8x512xf32> to vector<8x32xf32>
    %66 = math.tanh %65 : vector<8x32xf32>
    %67 = arith.mulf %63, %49 : vector<8x32xf32>
    %68 = arith.mulf %62, %66 : vector<8x32xf32>
    %69 = arith.addf %67, %68 : vector<8x32xf32>
    %70 = math.tanh %69 : vector<8x32xf32>
    %71 = arith.mulf %64, %70 : vector<8x32xf32>
    %c16_28 = arith.constant 16 : index
    %c0_29 = arith.constant 0 : index
    %72 = vector.load %arg14[%c16_28, %c0_29] : memref<64x32xf32, #tpu.memory_space<vmem>>, vector<8x32xf32>
    tpu.vector_store %arg14[%c16_28, %c0_29], %71 {strides = array<i32>} : memref<64x32xf32, #tpu.memory_space<vmem>>, vector<8x32xf32>,
    %c24 = arith.constant 24 : index
    %c0_30 = arith.constant 0 : index
    %73 = vector.load %arg13[%c24, %c0_30] : memref<64x512xf32, #tpu.memory_space<vmem>>, vector<8x512xf32>
    %cst_31 = arith.constant dense<0.000000e+00> : vector<8x512xf32>
    %74 = tpu.matmul %71, %10, %cst_31 {dimension_numbers = #tpu.dot_dimension_numbers<[1], [0], [0], [1], [0, 0, 1, 1], [], []>} : vector<8x32xf32>, vector<32x512xf32>, vector<8x512xf32> -> vector<8x512xf32>
    %75 = arith.addf %73, %74 : vector<8x512xf32>
    %76 = vector.extract_strided_slice %75 {offsets = [0, 0], sizes = [8, 384], strides = [1, 1]} : vector<8x512xf32> to vector<8x384xf32>
    %77 = arith.negf %76 : vector<8x384xf32>
    %78 = math.exp %77 : vector<8x384xf32>
    %cst_32 = arith.constant 1.000000e+00 : f32
    %79 = vector.broadcast %cst_32 : f32 to vector<8x384xf32>
    %80 = arith.addf %79, %78 : vector<8x384xf32>
    %81 = arith.divf %79, %80 : vector<8x384xf32>
    %82 = vector.extract_strided_slice %81 {offsets = [0, 0], sizes = [8, 32], strides = [1, 1]} : vector<8x384xf32> to vector<8x32xf32>
    %83 = vector.extract_strided_slice %81 {offsets = [0, 128], sizes = [8, 32], strides = [1, 1]} : vector<8x384xf32> to vector<8x32xf32>
    %84 = vector.extract_strided_slice %81 {offsets = [0, 256], sizes = [8, 32], strides = [1, 1]} : vector<8x384xf32> to vector<8x32xf32>
    %85 = vector.extract_strided_slice %75 {offsets = [0, 384], sizes = [8, 32], strides = [1, 1]} : vector<8x512xf32> to vector<8x32xf32>
    %86 = math.tanh %85 : vector<8x32xf32>
    %87 = arith.mulf %83, %69 : vector<8x32xf32>
    %88 = arith.mulf %82, %86 : vector<8x32xf32>
    %89 = arith.addf %87, %88 : vector<8x32xf32>
    %90 = math.tanh %89 : vector<8x32xf32>
    %91 = arith.mulf %84, %90 : vector<8x32xf32>
    %c24_33 = arith.constant 24 : index
    %c0_34 = arith.constant 0 : index
    %92 = vector.load %arg14[%c24_33, %c0_34] : memref<64x32xf32, #tpu.memory_space<vmem>>, vector<8x32xf32>
    tpu.vector_store %arg14[%c24_33, %c0_34], %91 {strides = array<i32>} : memref<64x32xf32, #tpu.memory_space<vmem>>, vector<8x32xf32>,
    %c32 = arith.constant 32 : index
    %c0_35 = arith.constant 0 : index
    %93 = vector.load %arg13[%c32, %c0_35] : memref<64x512xf32, #tpu.memory_space<vmem>>, vector<8x512xf32>
    %cst_36 = arith.constant dense<0.000000e+00> : vector<8x512xf32>
    %94 = tpu.matmul %91, %10, %cst_36 {dimension_numbers = #tpu.dot_dimension_numbers<[1], [0], [0], [1], [0, 0, 1, 1], [], []>} : vector<8x32xf32>, vector<32x512xf32>, vector<8x512xf32> -> vector<8x512xf32>
    %95 = arith.addf %93, %94 : vector<8x512xf32>
    %96 = vector.extract_strided_slice %95 {offsets = [0, 0], sizes = [8, 384], strides = [1, 1]} : vector<8x512xf32> to vector<8x384xf32>
    %97 = arith.negf %96 : vector<8x384xf32>
    %98 = math.exp %97 : vector<8x384xf32>
    %cst_37 = arith.constant 1.000000e+00 : f32
    %99 = vector.broadcast %cst_37 : f32 to vector<8x384xf32>
    %100 = arith.addf %99, %98 : vector<8x384xf32>
    %101 = arith.divf %99, %100 : vector<8x384xf32>
    %102 = vector.extract_strided_slice %101 {offsets = [0, 0], sizes = [8, 32], strides = [1, 1]} : vector<8x384xf32> to vector<8x32xf32>
    %103 = vector.extract_strided_slice %101 {offsets = [0, 128], sizes = [8, 32], strides = [1, 1]} : vector<8x384xf32> to vector<8x32xf32>
    %104 = vector.extract_strided_slice %101 {offsets = [0, 256], sizes = [8, 32], strides = [1, 1]} : vector<8x384xf32> to vector<8x32xf32>
    %105 = vector.extract_strided_slice %95 {offsets = [0, 384], sizes = [8, 32], strides = [1, 1]} : vector<8x512xf32> to vector<8x32xf32>
    %106 = math.tanh %105 : vector<8x32xf32>
    %107 = arith.mulf %103, %89 : vector<8x32xf32>
    %108 = arith.mulf %102, %106 : vector<8x32xf32>
    %109 = arith.addf %107, %108 : vector<8x32xf32>
    %110 = math.tanh %109 : vector<8x32xf32>
    %111 = arith.mulf %104, %110 : vector<8x32xf32>
    %c32_38 = arith.constant 32 : index
    %c0_39 = arith.constant 0 : index
    %112 = vector.load %arg14[%c32_38, %c0_39] : memref<64x32xf32, #tpu.memory_space<vmem>>, vector<8x32xf32>
    tpu.vector_store %arg14[%c32_38, %c0_39], %111 {strides = array<i32>} : memref<64x32xf32, #tpu.memory_space<vmem>>, vector<8x32xf32>,
    %c40 = arith.constant 40 : index
    %c0_40 = arith.constant 0 : index
    %113 = vector.load %arg13[%c40, %c0_40] : memref<64x512xf32, #tpu.memory_space<vmem>>, vector<8x512xf32>
    %cst_41 = arith.constant dense<0.000000e+00> : vector<8x512xf32>
    %114 = tpu.matmul %111, %10, %cst_41 {dimension_numbers = #tpu.dot_dimension_numbers<[1], [0], [0], [1], [0, 0, 1, 1], [], []>} : vector<8x32xf32>, vector<32x512xf32>, vector<8x512xf32> -> vector<8x512xf32>
    %115 = arith.addf %113, %114 : vector<8x512xf32>
    %116 = vector.extract_strided_slice %115 {offsets = [0, 0], sizes = [8, 384], strides = [1, 1]} : vector<8x512xf32> to vector<8x384xf32>
    %117 = arith.negf %116 : vector<8x384xf32>
    %118 = math.exp %117 : vector<8x384xf32>
    %cst_42 = arith.constant 1.000000e+00 : f32
    %119 = vector.broadcast %cst_42 : f32 to vector<8x384xf32>
    %120 = arith.addf %119, %118 : vector<8x384xf32>
    %121 = arith.divf %119, %120 : vector<8x384xf32>
    %122 = vector.extract_strided_slice %121 {offsets = [0, 0], sizes = [8, 32], strides = [1, 1]} : vector<8x384xf32> to vector<8x32xf32>
    %123 = vector.extract_strided_slice %121 {offsets = [0, 128], sizes = [8, 32], strides = [1, 1]} : vector<8x384xf32> to vector<8x32xf32>
    %124 = vector.extract_strided_slice %121 {offsets = [0, 256], sizes = [8, 32], strides = [1, 1]} : vector<8x384xf32> to vector<8x32xf32>
    %125 = vector.extract_strided_slice %115 {offsets = [0, 384], sizes = [8, 32], strides = [1, 1]} : vector<8x512xf32> to vector<8x32xf32>
    %126 = math.tanh %125 : vector<8x32xf32>
    %127 = arith.mulf %123, %109 : vector<8x32xf32>
    %128 = arith.mulf %122, %126 : vector<8x32xf32>
    %129 = arith.addf %127, %128 : vector<8x32xf32>
    %130 = math.tanh %129 : vector<8x32xf32>
    %131 = arith.mulf %124, %130 : vector<8x32xf32>
    %c40_43 = arith.constant 40 : index
    %c0_44 = arith.constant 0 : index
    %132 = vector.load %arg14[%c40_43, %c0_44] : memref<64x32xf32, #tpu.memory_space<vmem>>, vector<8x32xf32>
    tpu.vector_store %arg14[%c40_43, %c0_44], %131 {strides = array<i32>} : memref<64x32xf32, #tpu.memory_space<vmem>>, vector<8x32xf32>,
    %c48 = arith.constant 48 : index
    %c0_45 = arith.constant 0 : index
    %133 = vector.load %arg13[%c48, %c0_45] : memref<64x512xf32, #tpu.memory_space<vmem>>, vector<8x512xf32>
    %cst_46 = arith.constant dense<0.000000e+00> : vector<8x512xf32>
    %134 = tpu.matmul %131, %10, %cst_46 {dimension_numbers = #tpu.dot_dimension_numbers<[1], [0], [0], [1], [0, 0, 1, 1], [], []>} : vector<8x32xf32>, vector<32x512xf32>, vector<8x512xf32> -> vector<8x512xf32>
    %135 = arith.addf %133, %134 : vector<8x512xf32>
    %136 = vector.extract_strided_slice %135 {offsets = [0, 0], sizes = [8, 384], strides = [1, 1]} : vector<8x512xf32> to vector<8x384xf32>
    %137 = arith.negf %136 : vector<8x384xf32>
    %138 = math.exp %137 : vector<8x384xf32>
    %cst_47 = arith.constant 1.000000e+00 : f32
    %139 = vector.broadcast %cst_47 : f32 to vector<8x384xf32>
    %140 = arith.addf %139, %138 : vector<8x384xf32>
    %141 = arith.divf %139, %140 : vector<8x384xf32>
    %142 = vector.extract_strided_slice %141 {offsets = [0, 0], sizes = [8, 32], strides = [1, 1]} : vector<8x384xf32> to vector<8x32xf32>
    %143 = vector.extract_strided_slice %141 {offsets = [0, 128], sizes = [8, 32], strides = [1, 1]} : vector<8x384xf32> to vector<8x32xf32>
    %144 = vector.extract_strided_slice %141 {offsets = [0, 256], sizes = [8, 32], strides = [1, 1]} : vector<8x384xf32> to vector<8x32xf32>
    %145 = vector.extract_strided_slice %135 {offsets = [0, 384], sizes = [8, 32], strides = [1, 1]} : vector<8x512xf32> to vector<8x32xf32>
    %146 = math.tanh %145 : vector<8x32xf32>
    %147 = arith.mulf %143, %129 : vector<8x32xf32>
    %148 = arith.mulf %142, %146 : vector<8x32xf32>
    %149 = arith.addf %147, %148 : vector<8x32xf32>
    %150 = math.tanh %149 : vector<8x32xf32>
    %151 = arith.mulf %144, %150 : vector<8x32xf32>
    %c48_48 = arith.constant 48 : index
    %c0_49 = arith.constant 0 : index
    %152 = vector.load %arg14[%c48_48, %c0_49] : memref<64x32xf32, #tpu.memory_space<vmem>>, vector<8x32xf32>
    tpu.vector_store %arg14[%c48_48, %c0_49], %151 {strides = array<i32>} : memref<64x32xf32, #tpu.memory_space<vmem>>, vector<8x32xf32>,
    %c56 = arith.constant 56 : index
    %c0_50 = arith.constant 0 : index
    %153 = vector.load %arg13[%c56, %c0_50] : memref<64x512xf32, #tpu.memory_space<vmem>>, vector<8x512xf32>
    %cst_51 = arith.constant dense<0.000000e+00> : vector<8x512xf32>
    %154 = tpu.matmul %151, %10, %cst_51 {dimension_numbers = #tpu.dot_dimension_numbers<[1], [0], [0], [1], [0, 0, 1, 1], [], []>} : vector<8x32xf32>, vector<32x512xf32>, vector<8x512xf32> -> vector<8x512xf32>
    %155 = arith.addf %153, %154 : vector<8x512xf32>
    %156 = vector.extract_strided_slice %155 {offsets = [0, 0], sizes = [8, 384], strides = [1, 1]} : vector<8x512xf32> to vector<8x384xf32>
    %157 = arith.negf %156 : vector<8x384xf32>
    %158 = math.exp %157 : vector<8x384xf32>
    %cst_52 = arith.constant 1.000000e+00 : f32
    %159 = vector.broadcast %cst_52 : f32 to vector<8x384xf32>
    %160 = arith.addf %159, %158 : vector<8x384xf32>
    %161 = arith.divf %159, %160 : vector<8x384xf32>
    %162 = vector.extract_strided_slice %161 {offsets = [0, 0], sizes = [8, 32], strides = [1, 1]} : vector<8x384xf32> to vector<8x32xf32>
    %163 = vector.extract_strided_slice %161 {offsets = [0, 128], sizes = [8, 32], strides = [1, 1]} : vector<8x384xf32> to vector<8x32xf32>
    %164 = vector.extract_strided_slice %161 {offsets = [0, 256], sizes = [8, 32], strides = [1, 1]} : vector<8x384xf32> to vector<8x32xf32>
    %165 = vector.extract_strided_slice %155 {offsets = [0, 384], sizes = [8, 32], strides = [1, 1]} : vector<8x512xf32> to vector<8x32xf32>
    %166 = math.tanh %165 : vector<8x32xf32>
    %167 = arith.mulf %163, %149 : vector<8x32xf32>
    %168 = arith.mulf %162, %166 : vector<8x32xf32>
    %169 = arith.addf %167, %168 : vector<8x32xf32>
    %170 = math.tanh %169 : vector<8x32xf32>
    %171 = arith.mulf %164, %170 : vector<8x32xf32>
    %c56_53 = arith.constant 56 : index
    %c0_54 = arith.constant 0 : index
    %172 = vector.load %arg14[%c56_53, %c0_54] : memref<64x32xf32, #tpu.memory_space<vmem>>, vector<8x32xf32>
    tpu.vector_store %arg14[%c56_53, %c0_54], %171 {strides = array<i32>} : memref<64x32xf32, #tpu.memory_space<vmem>>, vector<8x32xf32>,
    %c0_55 = arith.constant 0 : index
    %c0_56 = arith.constant 0 : index
    %173 = vector.load %arg11[%c0_55, %c0_56] : memref<8x32xf32, #tpu.memory_space<vmem>>, vector<8x32xf32>
    tpu.vector_store %arg11[%c0_55, %c0_56], %171 {strides = array<i32>} : memref<8x32xf32, #tpu.memory_space<vmem>>, vector<8x32xf32>,
    %c0_57 = arith.constant 0 : index
    %c0_58 = arith.constant 0 : index
    %174 = vector.load %arg12[%c0_57, %c0_58] : memref<8x32xf32, #tpu.memory_space<vmem>>, vector<8x32xf32>
    tpu.vector_store %arg12[%c0_57, %c0_58], %169 {strides = array<i32>} : memref<8x32xf32, #tpu.memory_space<vmem>>, vector<8x32xf32>,
    %c0_59 = arith.constant 0 : index
    %c0_60 = arith.constant 0 : index
    %175 = vector.load %arg14[%c0_59, %c0_60] : memref<64x32xf32, #tpu.memory_space<vmem>>, vector<64x32xf32>
    %c0_61 = arith.constant 0 : index
    %c0_62 = arith.constant 0 : index
    %176 = vector.load %arg8[%c0_61, %c0_62] : memref<32x128xf32, #tpu.memory_space<vmem>>, vector<32x128xf32>
    %cst_63 = arith.constant dense<0.000000e+00> : vector<64x128xf32>
    %177 = tpu.matmul %175, %176, %cst_63 {dimension_numbers = #tpu.dot_dimension_numbers<[1], [0], [0], [1], [0, 0, 1, 1], [], []>} : vector<64x32xf32>, vector<32x128xf32>, vector<64x128xf32> -> vector<64x128xf32>
    %c0_64 = arith.constant 0 : index
    %c0_65 = arith.constant 0 : index
    %178 = vector.load %arg9[%c0_64, %c0_65] : memref<1x128xf32, #tpu.memory_space<vmem>>, vector<1x128xf32>
    %179 = vector.broadcast %178 : vector<1x128xf32> to vector<64x128xf32>
    %180 = arith.addf %177, %179 : vector<64x128xf32>
    %c0_66 = arith.constant 0 : index
    %c0_67 = arith.constant 0 : index
    %181 = vector.load %arg10[%c0_66, %c0_67] : memref<64x128xf32, #tpu.memory_space<vmem>>, vector<64x128xf32>
    tpu.vector_store %arg10[%c0_66, %c0_67], %180 {strides = array<i32>} : memref<64x128xf32, #tpu.memory_space<vmem>>, vector<64x128xf32>,
    return
  }
  func.func @transform_0(%arg0: i32, %arg1: i32) -> (i32, i32) {
    %c1_i32 = arith.constant 1 : i32
    %0 = arith.muli %arg0, %c1_i32 : i32
    %1 = arith.addi %0, %arg1 : i32
    %c0_i32 = arith.constant 0 : i32
    %c0_i32_0 = arith.constant 0 : i32
    return %1, %c0_i32 : i32, i32
  }
  func.func @transform_1(%arg0: i32, %arg1: i32) -> (i32, i32) {
    %c0_i32 = arith.constant 0 : i32
    %c0_i32_0 = arith.constant 0 : i32
    return %arg0, %c0_i32 : i32, i32
  }
  func.func @transform_2(%arg0: i32, %arg1: i32) -> (i32, i32) {
    %c0_i32 = arith.constant 0 : i32
    %c0_i32_0 = arith.constant 0 : i32
    return %arg0, %c0_i32 : i32, i32
  }
  func.func @transform_3(%arg0: i32, %arg1: i32) -> (i32, i32) {
    %c0_i32 = arith.constant 0 : i32
    %c0_i32_0 = arith.constant 0 : i32
    %c0_i32_1 = arith.constant 0 : i32
    return %c0_i32, %c0_i32_0 : i32, i32
  }
  func.func @transform_4(%arg0: i32, %arg1: i32) -> (i32, i32) {
    %c0_i32 = arith.constant 0 : i32
    %c0_i32_0 = arith.constant 0 : i32
    %c0_i32_1 = arith.constant 0 : i32
    return %c0_i32, %c0_i32_0 : i32, i32
  }
  func.func @transform_5(%arg0: i32, %arg1: i32) -> (i32, i32) {
    %c0_i32 = arith.constant 0 : i32
    %c0_i32_0 = arith.constant 0 : i32
    %c0_i32_1 = arith.constant 0 : i32
    return %c0_i32, %c0_i32_0 : i32, i32
  }
  func.func @transform_6(%arg0: i32, %arg1: i32) -> (i32, i32) {
    %c0_i32 = arith.constant 0 : i32
    %c0_i32_0 = arith.constant 0 : i32
    %c0_i32_1 = arith.constant 0 : i32
    return %c0_i32, %c0_i32_0 : i32, i32
  }
  func.func @transform_7(%arg0: i32, %arg1: i32) -> (i32, i32) {
    %c0_i32 = arith.constant 0 : i32
    %c0_i32_0 = arith.constant 0 : i32
    %c0_i32_1 = arith.constant 0 : i32
    return %c0_i32, %c0_i32_0 : i32, i32
  }
  func.func @transform_8(%arg0: i32, %arg1: i32) -> (i32, i32) {
    %c1_i32 = arith.constant 1 : i32
    %0 = arith.muli %arg0, %c1_i32 : i32
    %1 = arith.addi %0, %arg1 : i32
    %c0_i32 = arith.constant 0 : i32
    %c0_i32_0 = arith.constant 0 : i32
    return %1, %c0_i32 : i32, i32
  }
}

</mosaic_0001>

<llo_original>
// kernel: lstm_layers_forward.1
$region0: #{lstm_layers_forward.1}
  #allocation0 [shape = 'u32[]', space=smem, size = 0x4, offset = 0x4, fixed_abs, tag = 'smem constant byte address 0x4 - core index']
  #allocation1 [shape = 'u32[144,128]{1,0:T(1,128)}', space=vmem, size = 0x12000, scoped, tag = 'internal scratch']
  #allocation2 [shape = 'f32[8,32]{1,0:T(8,128)}', space=vmem, size = 0x1000, scoped, tag = 'scratch operand']
  #allocation3 [shape = 'f32[8,32]{1,0:T(8,128)}', space=vmem, size = 0x1000, scoped, tag = 'scratch operand']
  #allocation4 [shape = 'f32[64,512]{1,0:T(8,128)}', space=vmem, size = 0x20000, scoped, tag = 'scratch operand']
  #allocation5 [shape = 'f32[64,32]{1,0:T(8,128)}', space=vmem, size = 0x8000, scoped, tag = 'scratch operand']
  %s0 = inlined_call_operand.vmem [shape: f32[64,4], index: 0, kind: input, shape index: {}]
  %s1 = inlined_call_operand.vmem [shape: f32[8,32], index: 1, kind: input, shape index: {}]
  %s2 = inlined_call_operand.vmem [shape: f32[8,32], index: 2, kind: input, shape index: {}]
  %s3 = inlined_call_operand.vmem [shape: f32[4,512], index: 3, kind: input, shape index: {}]
  %s4 = inlined_call_operand.vmem [shape: f32[32,512], index: 4, kind: input, shape index: {}]
  %s5 = inlined_call_operand.vmem [shape: f32[1,512], index: 5, kind: input, shape index: {}]
  %s6 = inlined_call_operand.vmem [shape: f32[32,128], index: 6, kind: input, shape index: {}]
  %s7 = inlined_call_operand.vmem [shape: f32[1,128], index: 7, kind: input, shape index: {}]
  %s8 = inlined_call_operand.vmem [shape: f32[64,128], index: 8, kind: output, shape index: {}]
  %s9 = sld [smem:[#allocation0]]
  $region46: #{lstm_layers_forward.1} parent=0
    _
  %s11 = ssub.s32 1, %s9
  %s12 = scalar_select 0, %s11, %s9
  // Predicated region
  $region2: #{lstm_layers_forward.1} parent=0 // pred_check
    _
  $region3: #{lstm_layers_forward.1} parent=0 // pred_check_branch
    %14 = sbr.rel (0) target = $region5
  $region4: #{lstm_layers_forward.1} parent=0 // pred_region
    %s15 = sadd.s32 0, 0
    %s16 = smul.u32 8, %s15
    %p17 = scmp.lt.s32.totalorder %s16, 7
    %s18 = scalar_select %p17, %s16, 7
    %s19 = smul.addr %s18, 8
    %s20 = scalar_lea.vmem %s0, %s19
    %s21 = sadd.s32 0, 0
    %s22 = smul.u32 8, %s21
  $region5: #{lstm_layers_forward.1} parent=0 // pred_fallthru
    _
  // Predicated region
  $region6: #{lstm_layers_forward.1} parent=0 // pred_check
    _
  $region7: #{lstm_layers_forward.1} parent=0 // pred_check_branch
    %24 = sbr.rel (0) target = $region9
  $region8: #{lstm_layers_forward.1} parent=0 // pred_region
    _
  $region9: #{lstm_layers_forward.1} parent=0 // pred_fallthru
    _
  // Predicated region
  $region10: #{lstm_layers_forward.1} parent=0 // pred_check
    _
  $region11: #{lstm_layers_forward.1} parent=0 // pred_check_branch
    %26 = sbr.rel (0) target = $region13
  $region12: #{lstm_layers_forward.1} parent=0 // pred_region
    _
  $region13: #{lstm_layers_forward.1} parent=0 // pred_fallthru
    _
  // Predicated region
  $region14: #{lstm_layers_forward.1} parent=0 // pred_check
    _
  $region15: #{lstm_layers_forward.1} parent=0 // pred_check_branch
    %28 = sbr.rel (0) target = $region17
  $region16: #{lstm_layers_forward.1} parent=0 // pred_region
    _
  $region17: #{lstm_layers_forward.1} parent=0 // pred_fallthru
    _
  // Predicated region
  $region18: #{lstm_layers_forward.1} parent=0 // pred_check
    _
  $region19: #{lstm_layers_forward.1} parent=0 // pred_check_branch
    %30 = sbr.rel (0) target = $region21
  $region20: #{lstm_layers_forward.1} parent=0 // pred_region
    _
  $region21: #{lstm_layers_forward.1} parent=0 // pred_fallthru
    _
  // Predicated region
  $region22: #{lstm_layers_forward.1} parent=0 // pred_check
    _
  $region23: #{lstm_layers_forward.1} parent=0 // pred_check_branch
    %32 = sbr.rel (0) target = $region25
  $region24: #{lstm_layers_forward.1} parent=0 // pred_region
    _
  $region25: #{lstm_layers_forward.1} parent=0 // pred_fallthru
    _
  // Predicated region
  $region26: #{lstm_layers_forward.1} parent=0 // pred_check
    _
  $region27: #{lstm_layers_forward.1} parent=0 // pred_check_branch
    %34 = sbr.rel (0) target = $region29
  $region28: #{lstm_layers_forward.1} parent=0 // pred_region
    _
  $region29: #{lstm_layers_forward.1} parent=0 // pred_fallthru
    _
  // Predicated region
  $region30: #{lstm_layers_forward.1} parent=0 // pred_check
    _
  $region31: #{lstm_layers_forward.1} parent=0 // pred_check_branch
    %36 = sbr.rel (0) target = $region33
  $region32: #{lstm_layers_forward.1} parent=0 // pred_region
    _
  $region33: #{lstm_layers_forward.1} parent=0 // pred_fallthru
    _
  %s37 = sadd.s32 0, 0
  %s38 = smul.u32 8, %s37
  %p39 = scmp.lt.s32.totalorder %s38, 7
  %s40 = scalar_select %p39, %s38, 7
  %s41 = smul.addr %s40, 8
  %s42 = scalar_lea.vmem %s0, %s41
  %s43 = sadd.s32 0, 0
  %s44 = smul.u32 8, %s43
  %p45 = scmp.lt.s32.totalorder %s44, 7
  %s46 = scalar_select %p45, %s44, 7
  %s47 = smul.addr %s46, 8
  %s48 = scalar_lea.vmem %s8, %s47
  %s49 = sadd.s32 0, 0
  %s50 = smul.u32 8, %s49
  %p51 = scmp.lt.s32.totalorder %s50, 7
  %s52 = scalar_select %p51, %s50, 7
  %s53 = smul.addr %s52, 8
  %s54 = scalar_lea.vmem %s0, %s53
  %s55 = sadd.s32 0, 0
  %s56 = smul.u32 8, %s55
  %s57 = sadd.s32 0, 0
  %s58 = smul.u32 8, %s57
  %p59 = scmp.lt.s32.totalorder %s58, 7
  %s60 = scalar_select %p59, %s58, 7
  %s61 = smul.addr %s60, 8
  %s62 = scalar_lea.vmem %s8, %s61
  %s63 = sadd.s32 0, 0
  %s64 = smul.u32 8, %s63
  %p65 = scmp.eq.s32.totalorder 0, 0
  // Predicated region
  $region34: #{lstm_layers_forward.1} parent=0 // pred_check
    %p66 = pneg %p65
  $region35: #{lstm_layers_forward.1} parent=0 // pred_check_branch
    %68 = sbr.rel (%p66) target = $region37
  $region36: #{lstm_layers_forward.1} parent=0 // pred_region
    %v69 = vld [vmem:[%s1] sm:$0xff]
    %vm70 = vcmask 261120
    %71 = vst.msk [vmem:[#allocation2] sm:$0xff] %vm70, %v69
    %v72 = vld [vmem:[%s2] sm:$0xff]
    %73 = vst.msk [vmem:[#allocation3] sm:$0xff] %vm70, %v72
  $region37: #{lstm_layers_forward.1} parent=0 // pred_fallthru
    _
  %v74 = vld [vmem:[%s54] sm:$0xff]
  %v75 = vld [vmem:[%s54 + $0x8] sm:$0xff]
  %v76 = vld [vmem:[%s54 + $0x10] sm:$0xff]
  %v77 = vld [vmem:[%s54 + $0x18] sm:$0xff]
  %v78 = vld [vmem:[%s54 + $0x20] sm:$0xff]
  %v79 = vld [vmem:[%s54 + $0x28] sm:$0xff]
  %v80 = vld [vmem:[%s54 + $0x30] sm:$0xff]
  %v81 = vld [vmem:[%s54 + $0x38] sm:$0xff]
  %v82 = vld [vmem:[%s3] sm:$0xff]
  %v83 = vld [vmem:[%s3 + $0x8] sm:$0xff]
  %v84 = vld [vmem:[%s5] sm:$0xf]
  %v86 = vlaneseq
  %v87 = vshrl.u32 %v86, 7
  %v88 = vsub.s32 0, %v87
  %v89 = vrot.slane %v84, %v88
  %v90 = vlaneseq
  %v91 = vshrl.u32 %v90, 7
  %v92 = vsub.s32 1, %v91
  %v93 = vrot.slane %v84, %v92
  %v94 = vlaneseq
  %v95 = vshrl.u32 %v94, 7
  %v96 = vsub.s32 2, %v95
  %v97 = vrot.slane %v84, %v96
  %v98 = vlaneseq
  %v99 = vshrl.u32 %v98, 7
  %v100 = vsub.s32 3, %v99
  %v101 = vrot.slane %v84, %v100
  %v108 = vcombine.high %v82, %v82
  %v109 = vcombine.high %v83, %v83
  %vm110 = vcmask 31744
  %v112 = vsel %vm110, %v74, 0
  %v115 = vsel %vm110, %v75, 0
  %v118 = vsel %vm110, %v76, 0
  %v121 = vsel %vm110, %v77, 0
  %v124 = vsel %vm110, %v78, 0
  %v127 = vsel %vm110, %v79, 0
  %v130 = vsel %vm110, %v80, 0
  %v133 = vsel %vm110, %v81, 0
  %vm135 = vcmask 1043456
  %v136 = vsel %vm135, %v82, 0
  %v138 = vsel %vm135, %v108, 0
  %v140 = vsel %vm135, %v83, 0
  %v142 = vsel %vm135, %v109, 0
  %144 = vmatprep.subr.mxu0 %v138
  %145 = vmatpush1.msra.mxu0 %v136
  %146 = vmatprep.subr.mxu0 0.0
  %147 = vmatpush1.msra.mxu0 0.0
  %148 = vmatprep.subr.mxu0 0.0
  %149 = vmatpush1.msra.mxu0 0.0
  %150 = vmatprep.subr.mxu0 0.0
  %151 = vmatpush1.msra.mxu0 0.0
  %152 = vmatprep.subr.mxu0 0.0
  %153 = vmatpush1.msra.mxu0 0.0
  %154 = vmatprep.subr.mxu0 0.0
  %155 = vmatpush1.msra.mxu0 0.0
  %156 = vmatprep.subr.mxu0 0.0
  %157 = vmatpush1.msra.mxu0 0.0
  %158 = vmatprep.subr.mxu0 0.0
  %159 = vmatpush1.msra.mxu0 0.0
  %160 = vmatprep.subr.mxu0 0.0
  %161 = vmatpush1.msra.mxu0 0.0
  %162 = vmatprep.subr.mxu0 0.0
  %163 = vmatpush1.msra.mxu0 0.0
  %164 = vmatprep.subr.mxu0 0.0
  %165 = vmatpush1.msra.mxu0 0.0
  %166 = vmatprep.subr.mxu0 0.0
  %167 = vmatpush1.msra.mxu0 0.0
  %168 = vmatprep.subr.mxu0 0.0
  %169 = vmatpush1.msra.mxu0 0.0
  %170 = vmatprep.subr.mxu0 0.0
  %171 = vmatpush1.msra.mxu0 0.0
  %172 = vmatprep.subr.mxu0 0.0
  %173 = vmatpush1.msra.mxu0 0.0
  %174 = vmatprep.subr.mxu0 0.0
  %175 = vmatpush1.msra.mxu0 0.0
  %176 = vmatprep.subr.mxu0 0.0
  %177 = vmatpush1.msra.mxu0 0.0
  %178 = vmatprep.subr.mxu0 0.0
  %179 = vmatpush1.msra.mxu0 0.0
  %180 = vmatprep.subr.mxu0 0.0
  %181 = vmatpush1.msra.mxu0 0.0
  %182 = vmatprep.subr.mxu0 0.0
  %183 = vmatpush1.msra.mxu0 0.0
  %184 = vmatprep.subr.mxu0 0.0
  %185 = vmatpush1.msra.mxu0 0.0
  %186 = vmatprep.subr.mxu0 0.0
  %187 = vmatpush1.msra.mxu0 0.0
  %188 = vmatprep.subr.mxu0 0.0
  %189 = vmatpush1.msra.mxu0 0.0
  %190 = vmatprep.subr.mxu0 0.0
  %191 = vmatpush1.msra.mxu0 0.0
  %192 = vmatprep.subr.mxu0 0.0
  %193 = vmatpush1.msra.mxu0 0.0
  %194 = vmatprep.subr.mxu0 0.0
  %195 = vmatpush1.msra.mxu0 0.0
  %196 = vmatprep.subr.mxu0 0.0
  %197 = vmatpush1.msra.mxu0 0.0
  %198 = vmatprep.subr.mxu0 0.0
  %199 = vmatpush1.msra.mxu0 0.0
  %200 = vmatprep.subr.mxu0 0.0
  %201 = vmatpush1.msra.mxu0 0.0
  %202 = vmatprep.subr.mxu0 0.0
  %203 = vmatpush1.msra.mxu0 0.0
  %204 = vmatprep.subr.mxu0 0.0
  %205 = vmatpush1.msra.mxu0 0.0
  %206 = vmatprep.subr.mxu0 0.0
  %207 = vmatpush1.msra.mxu0 0.0
  %208 = vmatprep.mubr.f32.mxu0 0.0
  %209 = vmatmul.mubr.f32.gmra.mrb[0].mxu0 %v112
  %v210 = vpop.f32.mrb[0].mxu0
  %v211 = vadd.f32 %v89, %v210
  %v212 = vpop.f32.mrb[0].mxu0
  %v213 = vadd.f32 %v93, %v212
  %214 = vmatprep.mubr.f32.mxu0 0.0
  %215 = vmatmul.mubr.f32.gmra.mrb[0].mxu0 %v115
  %v216 = vpop.f32.mrb[0].mxu0
  %v217 = vadd.f32 %v89, %v216
  %v218 = vpop.f32.mrb[0].mxu0
  %v219 = vadd.f32 %v93, %v218
  %220 = vmatprep.mubr.f32.mxu0 0.0
  %221 = vmatmul.mubr.f32.gmra.mrb[0].mxu0 %v118
  %v222 = vpop.f32.mrb[0].mxu0
  %v223 = vadd.f32 %v89, %v222
  %v224 = vpop.f32.mrb[0].mxu0
  %v225 = vadd.f32 %v93, %v224
  %226 = vmatprep.mubr.f32.mxu0 0.0
  %227 = vmatmul.mubr.f32.gmra.mrb[0].mxu0 %v121
  %v228 = vpop.f32.mrb[0].mxu0
  %v229 = vadd.f32 %v89, %v228
  %v230 = vpop.f32.mrb[0].mxu0
  %v231 = vadd.f32 %v93, %v230
  %232 = vmatprep.mubr.f32.mxu0 0.0
  %233 = vmatmul.mubr.f32.gmra.mrb[0].mxu0 %v124
  %v234 = vpop.f32.mrb[0].mxu0
  %v235 = vadd.f32 %v89, %v234
  %v236 = vpop.f32.mrb[0].mxu0
  %v237 = vadd.f32 %v93, %v236
  %238 = vmatprep.mubr.f32.mxu0 0.0
  %239 = vmatmul.mubr.f32.gmra.mrb[0].mxu0 %v127
  %v240 = vpop.f32.mrb[0].mxu0
  %v241 = vadd.f32 %v89, %v240
  %v242 = vpop.f32.mrb[0].mxu0
  %v243 = vadd.f32 %v93, %v242
  %244 = vmatprep.mubr.f32.mxu0 0.0
  %245 = vmatmul.mubr.f32.gmra.mrb[0].mxu0 %v130
  %v246 = vpop.f32.mrb[0].mxu0
  %v247 = vadd.f32 %v89, %v246
  %v248 = vpop.f32.mrb[0].mxu0
  %v249 = vadd.f32 %v93, %v248
  %250 = vmatprep.mubr.f32.mxu0 0.0
  %251 = vmatmul.mubr.f32.gmra.mrb[0].mxu0 %v133
  %v252 = vpop.f32.mrb[0].mxu0
  %v253 = vadd.f32 %v89, %v252
  %v254 = vpop.f32.mrb[0].mxu0
  %v255 = vadd.f32 %v93, %v254
  %256 = vdwg.mxu0
  %257 = vmatprep.subr.mxu0 %v142
  %258 = vmatpush1.msra.mxu0 %v140
  %259 = vmatprep.subr.mxu0 0.0
  %260 = vmatpush1.msra.mxu0 0.0
  %261 = vmatprep.subr.mxu0 0.0
  %262 = vmatpush1.msra.mxu0 0.0
  %263 = vmatprep.subr.mxu0 0.0
  %264 = vmatpush1.msra.mxu0 0.0
  %265 = vmatprep.subr.mxu0 0.0
  %266 = vmatpush1.msra.mxu0 0.0
  %267 = vmatprep.subr.mxu0 0.0
  %268 = vmatpush1.msra.mxu0 0.0
  %269 = vmatprep.subr.mxu0 0.0
  %270 = vmatpush1.msra.mxu0 0.0
  %271 = vmatprep.subr.mxu0 0.0
  %272 = vmatpush1.msra.mxu0 0.0
  %273 = vmatprep.subr.mxu0 0.0
  %274 = vmatpush1.msra.mxu0 0.0
  %275 = vmatprep.subr.mxu0 0.0
  %276 = vmatpush1.msra.mxu0 0.0
  %277 = vmatprep.subr.mxu0 0.0
  %278 = vmatpush1.msra.mxu0 0.0
  %279 = vmatprep.subr.mxu0 0.0
  %280 = vmatpush1.msra.mxu0 0.0
  %281 = vmatprep.subr.mxu0 0.0
  %282 = vmatpush1.msra.mxu0 0.0
  %283 = vmatprep.subr.mxu0 0.0
  %284 = vmatpush1.msra.mxu0 0.0
  %285 = vmatprep.subr.mxu0 0.0
  %286 = vmatpush1.msra.mxu0 0.0
  %287 = vmatprep.subr.mxu0 0.0
  %288 = vmatpush1.msra.mxu0 0.0
  %289 = vmatprep.subr.mxu0 0.0
  %290 = vmatpush1.msra.mxu0 0.0
  %291 = vmatprep.subr.mxu0 0.0
  %292 = vmatpush1.msra.mxu0 0.0
  %293 = vmatprep.subr.mxu0 0.0
  %294 = vmatpush1.msra.mxu0 0.0
  %295 = vmatprep.subr.mxu0 0.0
  %296 = vmatpush1.msra.mxu0 0.0
  %297 = vmatprep.subr.mxu0 0.0
  %298 = vmatpush1.msra.mxu0 0.0
  %299 = vmatprep.subr.mxu0 0.0
  %300 = vmatpush1.msra.mxu0 0.0
  %301 = vmatprep.subr.mxu0 0.0
  %302 = vmatpush1.msra.mxu0 0.0
  %303 = vmatprep.subr.mxu0 0.0
  %304 = vmatpush1.msra.mxu0 0.0
  %305 = vmatprep.subr.mxu0 0.0
  %306 = vmatpush1.msra.mxu0 0.0
  %307 = vmatprep.subr.mxu0 0.0
  %308 = vmatpush1.msra.mxu0 0.0
  %309 = vmatprep.subr.mxu0 0.0
  %310 = vmatpush1.msra.mxu0 0.0
  %311 = vmatprep.subr.mxu0 0.0
  %312 = vmatpush1.msra.mxu0 0.0
  %313 = vmatprep.subr.mxu0 0.0
  %314 = vmatpush1.msra.mxu0 0.0
  %315 = vmatprep.subr.mxu0 0.0
  %316 = vmatpush1.msra.mxu0 0.0
  %317 = vmatprep.subr.mxu0 0.0
  %318 = vmatpush1.msra.mxu0 0.0
  %319 = vmatprep.subr.mxu0 0.0
  %320 = vmatpush1.msra.mxu0 0.0
  %321 = vmatprep.mubr.f32.mxu0 0.0
  %322 = vmatmul.mubr.f32.gmra.mrb[0].mxu0 %v112
  %v323 = vpop.f32.mrb[0].mxu0
  %v324 = vadd.f32 %v97, %v323
  %v325 = vpop.f32.mrb[0].mxu0
  %v326 = vadd.f32 %v101, %v325
  %327 = vmatprep.mubr.f32.mxu0 0.0
  %328 = vmatmul.mubr.f32.gmra.mrb[0].mxu0 %v115
  %v329 = vpop.f32.mrb[0].mxu0
  %v330 = vadd.f32 %v97, %v329
  %v331 = vpop.f32.mrb[0].mxu0
  %v332 = vadd.f32 %v101, %v331
  %333 = vmatprep.mubr.f32.mxu0 0.0
  %334 = vmatmul.mubr.f32.gmra.mrb[0].mxu0 %v118
  %v335 = vpop.f32.mrb[0].mxu0
  %v336 = vadd.f32 %v97, %v335
  %v337 = vpop.f32.mrb[0].mxu0
  %v338 = vadd.f32 %v101, %v337
  %339 = vmatprep.mubr.f32.mxu0 0.0
  %340 = vmatmul.mubr.f32.gmra.mrb[0].mxu0 %v121
  %v341 = vpop.f32.mrb[0].mxu0
  %v342 = vadd.f32 %v97, %v341
  %v343 = vpop.f32.mrb[0].mxu0
  %v344 = vadd.f32 %v101, %v343
  %345 = vmatprep.mubr.f32.mxu0 0.0
  %346 = vmatmul.mubr.f32.gmra.mrb[0].mxu0 %v124
  %v347 = vpop.f32.mrb[0].mxu0
  %v348 = vadd.f32 %v97, %v347
  %v349 = vpop.f32.mrb[0].mxu0
  %v350 = vadd.f32 %v101, %v349
  %351 = vmatprep.mubr.f32.mxu0 0.0
  %352 = vmatmul.mubr.f32.gmra.mrb[0].mxu0 %v127
  %v353 = vpop.f32.mrb[0].mxu0
  %v354 = vadd.f32 %v97, %v353
  %v355 = vpop.f32.mrb[0].mxu0
  %v356 = vadd.f32 %v101, %v355
  %357 = vmatprep.mubr.f32.mxu0 0.0
  %358 = vmatmul.mubr.f32.gmra.mrb[0].mxu0 %v130
  %v359 = vpop.f32.mrb[0].mxu0
  %v360 = vadd.f32 %v97, %v359
  %v361 = vpop.f32.mrb[0].mxu0
  %v362 = vadd.f32 %v101, %v361
  %363 = vmatprep.mubr.f32.mxu0 0.0
  %364 = vmatmul.mubr.f32.gmra.mrb[0].mxu0 %v133
  %v365 = vpop.f32.mrb[0].mxu0
  %v366 = vadd.f32 %v97, %v365
  %v367 = vpop.f32.mrb[0].mxu0
  %v368 = vadd.f32 %v101, %v367
  %369 = vdwg.mxu0
  %370 = vst [vmem:[#allocation4] sm:$0xff] %v211
  %371 = vst [vmem:[#allocation4 + $0x8] sm:$0xff] %v213
  %372 = vst [vmem:[#allocation4 + $0x10] sm:$0xff] %v324
  %373 = vst [vmem:[#allocation4 + $0x18] sm:$0xff] %v326
  %374 = vst [vmem:[#allocation4 + $0x20] sm:$0xff] %v217
  %375 = vst [vmem:[#allocation4 + $0x28] sm:$0xff] %v219
  %376 = vst [vmem:[#allocation4 + $0x30] sm:$0xff] %v330
  %377 = vst [vmem:[#allocation4 + $0x38] sm:$0xff] %v332
  %378 = vst [vmem:[#allocation4 + $0x40] sm:$0xff] %v223
  %379 = vst [vmem:[#allocation4 + $0x48] sm:$0xff] %v225
  %380 = vst [vmem:[#allocation4 + $0x50] sm:$0xff] %v336
  %381 = vst [vmem:[#allocation4 + $0x58] sm:$0xff] %v338
  %382 = vst [vmem:[#allocation4 + $0x60] sm:$0xff] %v229
  %383 = vst [vmem:[#allocation4 + $0x68] sm:$0xff] %v231
  %384 = vst [vmem:[#allocation4 + $0x70] sm:$0xff] %v342
  %385 = vst [vmem:[#allocation4 + $0x78] sm:$0xff] %v344
  %386 = vst [vmem:[#allocation4 + $0x80] sm:$0xff] %v235
  %387 = vst [vmem:[#allocation4 + $0x88] sm:$0xff] %v237
  %388 = vst [vmem:[#allocation4 + $0x90] sm:$0xff] %v348
  %389 = vst [vmem:[#allocation4 + $0x98] sm:$0xff] %v350
  %390 = vst [vmem:[#allocation4 + $0xa0] sm:$0xff] %v241
  %391 = vst [vmem:[#allocation4 + $0xa8] sm:$0xff] %v243
  %392 = vst [vmem:[#allocation4 + $0xb0] sm:$0xff] %v354
  %393 = vst [vmem:[#allocation4 + $0xb8] sm:$0xff] %v356
  %394 = vst [vmem:[#allocation4 + $0xc0] sm:$0xff] %v247
  %395 = vst [vmem:[#allocation4 + $0xc8] sm:$0xff] %v249
  %396 = vst [vmem:[#allocation4 + $0xd0] sm:$0xff] %v360
  %397 = vst [vmem:[#allocation4 + $0xd8] sm:$0xff] %v362
  %398 = vst [vmem:[#allocation4 + $0xe0] sm:$0xff] %v253
  %399 = vst [vmem:[#allocation4 + $0xe8] sm:$0xff] %v255
  %400 = vst [vmem:[#allocation4 + $0xf0] sm:$0xff] %v366
  %401 = vst [vmem:[#allocation4 + $0xf8] sm:$0xff] %v368
  %v402 = vld [vmem:[%s4] sm:$0xff]
  %v403 = vld [vmem:[%s4 + $0x8] sm:$0xff]
  %v404 = vld [vmem:[%s4 + $0x10] sm:$0xff]
  %v405 = vld [vmem:[%s4 + $0x18] sm:$0xff]
  %v406 = vld [vmem:[%s4 + $0x20] sm:$0xff]
  %v407 = vld [vmem:[%s4 + $0x28] sm:$0xff]
  %v408 = vld [vmem:[%s4 + $0x30] sm:$0xff]
  %v409 = vld [vmem:[%s4 + $0x38] sm:$0xff]
  %v410 = vld [vmem:[%s4 + $0x40] sm:$0xff]
  %v411 = vld [vmem:[%s4 + $0x48] sm:$0xff]
  %v412 = vld [vmem:[%s4 + $0x50] sm:$0xff]
  %v413 = vld [vmem:[%s4 + $0x58] sm:$0xff]
  %v414 = vld [vmem:[%s4 + $0x60] sm:$0xff]
  %v415 = vld [vmem:[%s4 + $0x68] sm:$0xff]
  %v416 = vld [vmem:[%s4 + $0x70] sm:$0xff]
  %v417 = vld [vmem:[%s4 + $0x78] sm:$0xff]
  %v418 = vld [vmem:[#allocation2] sm:$0xff]
  %v419 = vld [vmem:[#allocation3] sm:$0xff]
  %v420 = vld [vmem:[#allocation4] sm:$0xff]
  %v421 = vld [vmem:[#allocation4 + $0x8] sm:$0xff]
  %v422 = vld [vmem:[#allocation4 + $0x10] sm:$0xff]
  %v423 = vld [vmem:[#allocation4 + $0x18] sm:$0xff]
  %vm424 = vcmask 261120
  %v426 = vsel %vm424, %v418, 0
  %428 = vmatprep.subr.mxu0 %v403
  %429 = vmatpush1.msra.mxu0 %v402
  %430 = vmatprep.subr.mxu0 %v407
  %431 = vmatpush1.msra.mxu0 %v406
  %432 = vmatprep.subr.mxu0 %v411
  %433 = vmatpush1.msra.mxu0 %v410
  %434 = vmatprep.subr.mxu0 %v415
  %435 = vmatpush1.msra.mxu0 %v414
  %436 = vmatprep.subr.mxu0 0.0
  %437 = vmatpush1.msra.mxu0 0.0
  %438 = vmatprep.subr.mxu0 0.0
  %439 = vmatpush1.msra.mxu0 0.0
  %440 = vmatprep.subr.mxu0 0.0
  %441 = vmatpush1.msra.mxu0 0.0
  %442 = vmatprep.subr.mxu0 0.0
  %443 = vmatpush1.msra.mxu0 0.0
  %444 = vmatprep.subr.mxu0 0.0
  %445 = vmatpush1.msra.mxu0 0.0
  %446 = vmatprep.subr.mxu0 0.0
  %447 = vmatpush1.msra.mxu0 0.0
  %448 = vmatprep.subr.mxu0 0.0
  %449 = vmatpush1.msra.mxu0 0.0
  %450 = vmatprep.subr.mxu0 0.0
  %451 = vmatpush1.msra.mxu0 0.0
  %452 = vmatprep.subr.mxu0 0.0
  %453 = vmatpush1.msra.mxu0 0.0
  %454 = vmatprep.subr.mxu0 0.0
  %455 = vmatpush1.msra.mxu0 0.0
  %456 = vmatprep.subr.mxu0 0.0
  %457 = vmatpush1.msra.mxu0 0.0
  %458 = vmatprep.subr.mxu0 0.0
  %459 = vmatpush1.msra.mxu0 0.0
  %460 = vmatprep.subr.mxu0 0.0
  %461 = vmatpush1.msra.mxu0 0.0
  %462 = vmatprep.subr.mxu0 0.0
  %463 = vmatpush1.msra.mxu0 0.0
  %464 = vmatprep.subr.mxu0 0.0
  %465 = vmatpush1.msra.mxu0 0.0
  %466 = vmatprep.subr.mxu0 0.0
  %467 = vmatpush1.msra.mxu0 0.0
  %468 = vmatprep.subr.mxu0 0.0
  %469 = vmatpush1.msra.mxu0 0.0
  %470 = vmatprep.subr.mxu0 0.0
  %471 = vmatpush1.msra.mxu0 0.0
  %472 = vmatprep.subr.mxu0 0.0
  %473 = vmatpush1.msra.mxu0 0.0
  %474 = vmatprep.subr.mxu0 0.0
  %475 = vmatpush1.msra.mxu0 0.0
  %476 = vmatprep.subr.mxu0 0.0
  %477 = vmatpush1.msra.mxu0 0.0
  %478 = vmatprep.subr.mxu0 0.0
  %479 = vmatpush1.msra.mxu0 0.0
  %480 = vmatprep.subr.mxu0 0.0
  %481 = vmatpush1.msra.mxu0 0.0
  %482 = vmatprep.subr.mxu0 0.0
  %483 = vmatpush1.msra.mxu0 0.0
  %484 = vmatprep.subr.mxu0 0.0
  %485 = vmatpush1.msra.mxu0 0.0
  %486 = vmatprep.subr.mxu0 0.0
  %487 = vmatpush1.msra.mxu0 0.0
  %488 = vmatprep.subr.mxu0 0.0
  %489 = vmatpush1.msra.mxu0 0.0
  %490 = vmatprep.subr.mxu0 0.0
  %491 = vmatpush1.msra.mxu0 0.0
  %492 = vmatprep.mubr.f32.mxu0 0.0
  %493 = vmatmul.mubr.f32.gmra.mrb[0].mxu0 %v426
  %v494 = vpop.f32.mrb[0].mxu0
  %v495 = vadd.f32 0.0, %v494
  %v496 = vpop.f32.mrb[0].mxu0
  %v497 = vadd.f32 0.0, %v496
  %498 = vdwg.mxu0
  %499 = vmatprep.subr.mxu0 %v405
  %500 = vmatpush1.msra.mxu0 %v404
  %501 = vmatprep.subr.mxu0 %v409
  %502 = vmatpush1.msra.mxu0 %v408
  %503 = vmatprep.subr.mxu0 %v413
  %504 = vmatpush1.msra.mxu0 %v412
  %505 = vmatprep.subr.mxu0 %v417
  %506 = vmatpush1.msra.mxu0 %v416
  %507 = vmatprep.subr.mxu0 0.0
  %508 = vmatpush1.msra.mxu0 0.0
  %509 = vmatprep.subr.mxu0 0.0
  %510 = vmatpush1.msra.mxu0 0.0
  %511 = vmatprep.subr.mxu0 0.0
  %512 = vmatpush1.msra.mxu0 0.0
  %513 = vmatprep.subr.mxu0 0.0
  %514 = vmatpush1.msra.mxu0 0.0
  %515 = vmatprep.subr.mxu0 0.0
  %516 = vmatpush1.msra.mxu0 0.0
  %517 = vmatprep.subr.mxu0 0.0
  %518 = vmatpush1.msra.mxu0 0.0
  %519 = vmatprep.subr.mxu0 0.0
  %520 = vmatpush1.msra.mxu0 0.0
  %521 = vmatprep.subr.mxu0 0.0
  %522 = vmatpush1.msra.mxu0 0.0
  %523 = vmatprep.subr.mxu0 0.0
  %524 = vmatpush1.msra.mxu0 0.0
  %525 = vmatprep.subr.mxu0 0.0
  %526 = vmatpush1.msra.mxu0 0.0
  %527 = vmatprep.subr.mxu0 0.0
  %528 = vmatpush1.msra.mxu0 0.0
  %529 = vmatprep.subr.mxu0 0.0
  %530 = vmatpush1.msra.mxu0 0.0
  %531 = vmatprep.subr.mxu0 0.0
  %532 = vmatpush1.msra.mxu0 0.0
  %533 = vmatprep.subr.mxu0 0.0
  %534 = vmatpush1.msra.mxu0 0.0
  %535 = vmatprep.subr.mxu0 0.0
  %536 = vmatpush1.msra.mxu0 0.0
  %537 = vmatprep.subr.mxu0 0.0
  %538 = vmatpush1.msra.mxu0 0.0
  %539 = vmatprep.subr.mxu0 0.0
  %540 = vmatpush1.msra.mxu0 0.0
  %541 = vmatprep.subr.mxu0 0.0
  %542 = vmatpush1.msra.mxu0 0.0
  %543 = vmatprep.subr.mxu0 0.0
  %544 = vmatpush1.msra.mxu0 0.0
  %545 = vmatprep.subr.mxu0 0.0
  %546 = vmatpush1.msra.mxu0 0.0
  %547 = vmatprep.subr.mxu0 0.0
  %548 = vmatpush1.msra.mxu0 0.0
  %549 = vmatprep.subr.mxu0 0.0
  %550 = vmatpush1.msra.mxu0 0.0
  %551 = vmatprep.subr.mxu0 0.0
  %552 = vmatpush1.msra.mxu0 0.0
  %553 = vmatprep.subr.mxu0 0.0
  %554 = vmatpush1.msra.mxu0 0.0
  %555 = vmatprep.subr.mxu0 0.0
  %556 = vmatpush1.msra.mxu0 0.0
  %557 = vmatprep.subr.mxu0 0.0
  %558 = vmatpush1.msra.mxu0 0.0
  %559 = vmatprep.subr.mxu0 0.0
  %560 = vmatpush1.msra.mxu0 0.0
  %561 = vmatprep.subr.mxu0 0.0
  %562 = vmatpush1.msra.mxu0 0.0
  %563 = vmatprep.mubr.f32.mxu0 0.0
  %564 = vmatmul.mubr.f32.gmra.mrb[0].mxu0 %v426
  %v565 = vpop.f32.mrb[0].mxu0
  %v566 = vadd.f32 0.0, %v565
  %v567 = vpop.f32.mrb[0].mxu0
  %v568 = vadd.f32 0.0, %v567
  %569 = vdwg.mxu0
  %v570 = vadd.f32 %v420, %v495
  %v571 = vadd.f32 %v421, %v497
  %v572 = vadd.f32 %v422, %v566
  %v573 = vadd.f32 %v423, %v568
  %v574 = vxor.u32 %v570, 2147483648
  %v575 = vxor.u32 %v571, 2147483648
  %v576 = vxor.u32 %v572, 2147483648
  %v577 = vmul.f32 %v574, 1.442695
  %v578 = vpow.pop %v577
  %v579 = vmul.f32 %v575, 1.442695
  %v580 = vpow.pop %v579
  %v581 = vmul.f32 %v576, 1.442695
  %v582 = vpow.pop %v581
  %v583 = vadd.f32 %v578, 1.0
  %v584 = vadd.f32 %v580, 1.0
  %v585 = vadd.f32 %v582, 1.0
  %v586 = vrcp.pop %v583
  %v587 = vmul.f32 1.0, %v586
  %v588 = vrcp.pop %v584
  %v589 = vmul.f32 1.0, %v588
  %v590 = vrcp.pop %v585
  %v591 = vmul.f32 1.0, %v590
  %v592 = vtanh.pop %v573
  %v593 = vmul.f32 %v589, %v419
  %v594 = vmul.f32 %v587, %v592
  %v595 = vadd.f32 %v593, %v594
  %v596 = vtanh.pop %v595
  %v597 = vmul.f32 %v591, %v596
  %598 = vst.msk [vmem:[#allocation5] sm:$0xff] %vm424, %v597
  %v599 = vld [vmem:[#allocation4 + $0x20] sm:$0xff]
  %v600 = vld [vmem:[#allocation4 + $0x28] sm:$0xff]
  %v601 = vld [vmem:[#allocation4 + $0x30] sm:$0xff]
  %v602 = vld [vmem:[#allocation4 + $0x38] sm:$0xff]
  %v604 = vsel %vm424, %v597, 0
  %606 = vmatprep.subr.mxu0 %v403
  %607 = vmatpush1.msra.mxu0 %v402
  %608 = vmatprep.subr.mxu0 %v407
  %609 = vmatpush1.msra.mxu0 %v406
  %610 = vmatprep.subr.mxu0 %v411
  %611 = vmatpush1.msra.mxu0 %v410
  %612 = vmatprep.subr.mxu0 %v415
  %613 = vmatpush1.msra.mxu0 %v414
  %614 = vmatprep.subr.mxu0 0.0
  %615 = vmatpush1.msra.mxu0 0.0
  %616 = vmatprep.subr.mxu0 0.0
  %617 = vmatpush1.msra.mxu0 0.0
  %618 = vmatprep.subr.mxu0 0.0
  %619 = vmatpush1.msra.mxu0 0.0
  %620 = vmatprep.subr.mxu0 0.0
  %621 = vmatpush1.msra.mxu0 0.0
  %622 = vmatprep.subr.mxu0 0.0
  %623 = vmatpush1.msra.mxu0 0.0
  %624 = vmatprep.subr.mxu0 0.0
  %625 = vmatpush1.msra.mxu0 0.0
  %626 = vmatprep.subr.mxu0 0.0
  %627 = vmatpush1.msra.mxu0 0.0
  %628 = vmatprep.subr.mxu0 0.0
  %629 = vmatpush1.msra.mxu0 0.0
  %630 = vmatprep.subr.mxu0 0.0
  %631 = vmatpush1.msra.mxu0 0.0
  %632 = vmatprep.subr.mxu0 0.0
  %633 = vmatpush1.msra.mxu0 0.0
  %634 = vmatprep.subr.mxu0 0.0
  %635 = vmatpush1.msra.mxu0 0.0
  %636 = vmatprep.subr.mxu0 0.0
  %637 = vmatpush1.msra.mxu0 0.0
  %638 = vmatprep.subr.mxu0 0.0
  %639 = vmatpush1.msra.mxu0 0.0
  %640 = vmatprep.subr.mxu0 0.0
  %641 = vmatpush1.msra.mxu0 0.0
  %642 = vmatprep.subr.mxu0 0.0
  %643 = vmatpush1.msra.mxu0 0.0
  %644 = vmatprep.subr.mxu0 0.0
  %645 = vmatpush1.msra.mxu0 0.0
  %646 = vmatprep.subr.mxu0 0.0
  %647 = vmatpush1.msra.mxu0 0.0
  %648 = vmatprep.subr.mxu0 0.0
  %649 = vmatpush1.msra.mxu0 0.0
  %650 = vmatprep.subr.mxu0 0.0
  %651 = vmatpush1.msra.mxu0 0.0
  %652 = vmatprep.subr.mxu0 0.0
  %653 = vmatpush1.msra.mxu0 0.0
  %654 = vmatprep.subr.mxu0 0.0
  %655 = vmatpush1.msra.mxu0 0.0
  %656 = vmatprep.subr.mxu0 0.0
  %657 = vmatpush1.msra.mxu0 0.0
  %658 = vmatprep.subr.mxu0 0.0
  %659 = vmatpush1.msra.mxu0 0.0
  %660 = vmatprep.subr.mxu0 0.0
  %661 = vmatpush1.msra.mxu0 0.0
  %662 = vmatprep.subr.mxu0 0.0
  %663 = vmatpush1.msra.mxu0 0.0
  %664 = vmatprep.subr.mxu0 0.0
  %665 = vmatpush1.msra.mxu0 0.0
  %666 = vmatprep.subr.mxu0 0.0
  %667 = vmatpush1.msra.mxu0 0.0
  %668 = vmatprep.subr.mxu0 0.0
  %669 = vmatpush1.msra.mxu0 0.0
  %670 = vmatprep.mubr.f32.mxu0 0.0
  %671 = vmatmul.mubr.f32.gmra.mrb[0].mxu0 %v604
  %v672 = vpop.f32.mrb[0].mxu0
  %v673 = vadd.f32 0.0, %v672
  %v674 = vpop.f32.mrb[0].mxu0
  %v675 = vadd.f32 0.0, %v674
  %676 = vdwg.mxu0
  %677 = vmatprep.subr.mxu0 %v405
  %678 = vmatpush1.msra.mxu0 %v404
  %679 = vmatprep.subr.mxu0 %v409
  %680 = vmatpush1.msra.mxu0 %v408
  %681 = vmatprep.subr.mxu0 %v413
  %682 = vmatpush1.msra.mxu0 %v412
  %683 = vmatprep.subr.mxu0 %v417
  %684 = vmatpush1.msra.mxu0 %v416
  %685 = vmatprep.subr.mxu0 0.0
  %686 = vmatpush1.msra.mxu0 0.0
  %687 = vmatprep.subr.mxu0 0.0
  %688 = vmatpush1.msra.mxu0 0.0
  %689 = vmatprep.subr.mxu0 0.0
  %690 = vmatpush1.msra.mxu0 0.0
  %691 = vmatprep.subr.mxu0 0.0
  %692 = vmatpush1.msra.mxu0 0.0
  %693 = vmatprep.subr.mxu0 0.0
  %694 = vmatpush1.msra.mxu0 0.0
  %695 = vmatprep.subr.mxu0 0.0
  %696 = vmatpush1.msra.mxu0 0.0
  %697 = vmatprep.subr.mxu0 0.0
  %698 = vmatpush1.msra.mxu0 0.0
  %699 = vmatprep.subr.mxu0 0.0
  %700 = vmatpush1.msra.mxu0 0.0
  %701 = vmatprep.subr.mxu0 0.0
  %702 = vmatpush1.msra.mxu0 0.0
  %703 = vmatprep.subr.mxu0 0.0
  %704 = vmatpush1.msra.mxu0 0.0
  %705 = vmatprep.subr.mxu0 0.0
  %706 = vmatpush1.msra.mxu0 0.0
  %707 = vmatprep.subr.mxu0 0.0
  %708 = vmatpush1.msra.mxu0 0.0
  %709 = vmatprep.subr.mxu0 0.0
  %710 = vmatpush1.msra.mxu0 0.0
  %711 = vmatprep.subr.mxu0 0.0
  %712 = vmatpush1.msra.mxu0 0.0
  %713 = vmatprep.subr.mxu0 0.0
  %714 = vmatpush1.msra.mxu0 0.0
  %715 = vmatprep.subr.mxu0 0.0
  %716 = vmatpush1.msra.mxu0 0.0
  %717 = vmatprep.subr.mxu0 0.0
  %718 = vmatpush1.msra.mxu0 0.0
  %719 = vmatprep.subr.mxu0 0.0
  %720 = vmatpush1.msra.mxu0 0.0
  %721 = vmatprep.subr.mxu0 0.0
  %722 = vmatpush1.msra.mxu0 0.0
  %723 = vmatprep.subr.mxu0 0.0
  %724 = vmatpush1.msra.mxu0 0.0
  %725 = vmatprep.subr.mxu0 0.0
  %726 = vmatpush1.msra.mxu0 0.0
  %727 = vmatprep.subr.mxu0 0.0
  %728 = vmatpush1.msra.mxu0 0.0
  %729 = vmatprep.subr.mxu0 0.0
  %730 = vmatpush1.msra.mxu0 0.0
  %731 = vmatprep.subr.mxu0 0.0
  %732 = vmatpush1.msra.mxu0 0.0
  %733 = vmatprep.subr.mxu0 0.0
  %734 = vmatpush1.msra.mxu0 0.0
  %735 = vmatprep.subr.mxu0 0.0
  %736 = vmatpush1.msra.mxu0 0.0
  %737 = vmatprep.subr.mxu0 0.0
  %738 = vmatpush1.msra.mxu0 0.0
  %739 = vmatprep.subr.mxu0 0.0
  %740 = vmatpush1.msra.mxu0 0.0
  %741 = vmatprep.mubr.f32.mxu0 0.0
  %742 = vmatmul.mubr.f32.gmra.mrb[0].mxu0 %v604
  %v743 = vpop.f32.mrb[0].mxu0
  %v744 = vadd.f32 0.0, %v743
  %v745 = vpop.f32.mrb[0].mxu0
  %v746 = vadd.f32 0.0, %v745
  %747 = vdwg.mxu0
  %v748 = vadd.f32 %v599, %v673
  %v749 = vadd.f32 %v600, %v675
  %v750 = vadd.f32 %v601, %v744
  %v751 = vadd.f32 %v602, %v746
  %v752 = vxor.u32 %v748, 2147483648
  %v753 = vxor.u32 %v749, 2147483648
  %v754 = vxor.u32 %v750, 2147483648
  %v755 = vmul.f32 %v752, 1.442695
  %v756 = vpow.pop %v755
  %v757 = vmul.f32 %v753, 1.442695
  %v758 = vpow.pop %v757
  %v759 = vmul.f32 %v754, 1.442695
  %v760 = vpow.pop %v759
  %v761 = vadd.f32 %v756, 1.0
  %v762 = vadd.f32 %v758, 1.0
  %v763 = vadd.f32 %v760, 1.0
  %v764 = vrcp.pop %v761
  %v765 = vmul.f32 1.0, %v764
  %v766 = vrcp.pop %v762
  %v767 = vmul.f32 1.0, %v766
  %v768 = vrcp.pop %v763
  %v769 = vmul.f32 1.0, %v768
  %v770 = vtanh.pop %v751
  %v771 = vmul.f32 %v767, %v595
  %v772 = vmul.f32 %v765, %v770
  %v773 = vadd.f32 %v771, %v772
  %v774 = vtanh.pop %v773
  %v775 = vmul.f32 %v769, %v774
  %776 = vst.msk [vmem:[#allocation5 + $0x8] sm:$0xff] %vm424, %v775
  %v777 = vld [vmem:[#allocation4 + $0x40] sm:$0xff]
  %v778 = vld [vmem:[#allocation4 + $0x48] sm:$0xff]
  %v779 = vld [vmem:[#allocation4 + $0x50] sm:$0xff]
  %v780 = vld [vmem:[#allocation4 + $0x58] sm:$0xff]
  %v782 = vsel %vm424, %v775, 0
  %784 = vmatprep.subr.mxu0 %v403
  %785 = vmatpush1.msra.mxu0 %v402
  %786 = vmatprep.subr.mxu0 %v407
  %787 = vmatpush1.msra.mxu0 %v406
  %788 = vmatprep.subr.mxu0 %v411
  %789 = vmatpush1.msra.mxu0 %v410
  %790 = vmatprep.subr.mxu0 %v415
  %791 = vmatpush1.msra.mxu0 %v414
  %792 = vmatprep.subr.mxu0 0.0
  %793 = vmatpush1.msra.mxu0 0.0
  %794 = vmatprep.subr.mxu0 0.0
  %795 = vmatpush1.msra.mxu0 0.0
  %796 = vmatprep.subr.mxu0 0.0
  %797 = vmatpush1.msra.mxu0 0.0
  %798 = vmatprep.subr.mxu0 0.0
  %799 = vmatpush1.msra.mxu0 0.0
  %800 = vmatprep.subr.mxu0 0.0
  %801 = vmatpush1.msra.mxu0 0.0
  %802 = vmatprep.subr.mxu0 0.0
  %803 = vmatpush1.msra.mxu0 0.0
  %804 = vmatprep.subr.mxu0 0.0
  %805 = vmatpush1.msra.mxu0 0.0
  %806 = vmatprep.subr.mxu0 0.0
  %807 = vmatpush1.msra.mxu0 0.0
  %808 = vmatprep.subr.mxu0 0.0
  %809 = vmatpush1.msra.mxu0 0.0
  %810 = vmatprep.subr.mxu0 0.0
  %811 = vmatpush1.msra.mxu0 0.0
  %812 = vmatprep.subr.mxu0 0.0
  %813 = vmatpush1.msra.mxu0 0.0
  %814 = vmatprep.subr.mxu0 0.0
  %815 = vmatpush1.msra.mxu0 0.0
  %816 = vmatprep.subr.mxu0 0.0
  %817 = vmatpush1.msra.mxu0 0.0
  %818 = vmatprep.subr.mxu0 0.0
  %819 = vmatpush1.msra.mxu0 0.0
  %820 = vmatprep.subr.mxu0 0.0
  %821 = vmatpush1.msra.mxu0 0.0
  %822 = vmatprep.subr.mxu0 0.0
  %823 = vmatpush1.msra.mxu0 0.0
  %824 = vmatprep.subr.mxu0 0.0
  %825 = vmatpush1.msra.mxu0 0.0
  %826 = vmatprep.subr.mxu0 0.0
  %827 = vmatpush1.msra.mxu0 0.0
  %828 = vmatprep.subr.mxu0 0.0
  %829 = vmatpush1.msra.mxu0 0.0
  %830 = vmatprep.subr.mxu0 0.0
  %831 = vmatpush1.msra.mxu0 0.0
  %832 = vmatprep.subr.mxu0 0.0
  %833 = vmatpush1.msra.mxu0 0.0
  %834 = vmatprep.subr.mxu0 0.0
  %835 = vmatpush1.msra.mxu0 0.0
  %836 = vmatprep.subr.mxu0 0.0
  %837 = vmatpush1.msra.mxu0 0.0
  %838 = vmatprep.subr.mxu0 0.0
  %839 = vmatpush1.msra.mxu0 0.0
  %840 = vmatprep.subr.mxu0 0.0
  %841 = vmatpush1.msra.mxu0 0.0
  %842 = vmatprep.subr.mxu0 0.0
  %843 = vmatpush1.msra.mxu0 0.0
  %844 = vmatprep.subr.mxu0 0.0
  %845 = vmatpush1.msra.mxu0 0.0
  %846 = vmatprep.subr.mxu0 0.0
  %847 = vmatpush1.msra.mxu0 0.0
  %848 = vmatprep.mubr.f32.mxu0 0.0
  %849 = vmatmul.mubr.f32.gmra.mrb[0].mxu0 %v782
  %v850 = vpop.f32.mrb[0].mxu0
  %v851 = vadd.f32 0.0, %v850
  %v852 = vpop.f32.mrb[0].mxu0
  %v853 = vadd.f32 0.0, %v852
  %854 = vdwg.mxu0
  %855 = vmatprep.subr.mxu0 %v405
  %856 = vmatpush1.msra.mxu0 %v404
  %857 = vmatprep.subr.mxu0 %v409
  %858 = vmatpush1.msra.mxu0 %v408
  %859 = vmatprep.subr.mxu0 %v413
  %860 = vmatpush1.msra.mxu0 %v412
  %861 = vmatprep.subr.mxu0 %v417
  %862 = vmatpush1.msra.mxu0 %v416
  %863 = vmatprep.subr.mxu0 0.0
  %864 = vmatpush1.msra.mxu0 0.0
  %865 = vmatprep.subr.mxu0 0.0
  %866 = vmatpush1.msra.mxu0 0.0
  %867 = vmatprep.subr.mxu0 0.0
  %868 = vmatpush1.msra.mxu0 0.0
  %869 = vmatprep.subr.mxu0 0.0
  %870 = vmatpush1.msra.mxu0 0.0
  %871 = vmatprep.subr.mxu0 0.0
  %872 = vmatpush1.msra.mxu0 0.0
  %873 = vmatprep.subr.mxu0 0.0
  %874 = vmatpush1.msra.mxu0 0.0
  %875 = vmatprep.subr.mxu0 0.0
  %876 = vmatpush1.msra.mxu0 0.0
  %877 = vmatprep.subr.mxu0 0.0
  %878 = vmatpush1.msra.mxu0 0.0
  %879 = vmatprep.subr.mxu0 0.0
  %880 = vmatpush1.msra.mxu0 0.0
  %881 = vmatprep.subr.mxu0 0.0
  %882 = vmatpush1.msra.mxu0 0.0
  %883 = vmatprep.subr.mxu0 0.0
  %884 = vmatpush1.msra.mxu0 0.0
  %885 = vmatprep.subr.mxu0 0.0
  %886 = vmatpush1.msra.mxu0 0.0
  %887 = vmatprep.subr.mxu0 0.0
  %888 = vmatpush1.msra.mxu0 0.0
  %889 = vmatprep.subr.mxu0 0.0
  %890 = vmatpush1.msra.mxu0 0.0
  %891 = vmatprep.subr.mxu0 0.0
  %892 = vmatpush1.msra.mxu0 0.0
  %893 = vmatprep.subr.mxu0 0.0
  %894 = vmatpush1.msra.mxu0 0.0
  %895 = vmatprep.subr.mxu0 0.0
  %896 = vmatpush1.msra.mxu0 0.0
  %897 = vmatprep.subr.mxu0 0.0
  %898 = vmatpush1.msra.mxu0 0.0
  %899 = vmatprep.subr.mxu0 0.0
  %900 = vmatpush1.msra.mxu0 0.0
  %901 = vmatprep.subr.mxu0 0.0
  %902 = vmatpush1.msra.mxu0 0.0
  %903 = vmatprep.subr.mxu0 0.0
  %904 = vmatpush1.msra.mxu0 0.0
  %905 = vmatprep.subr.mxu0 0.0
  %906 = vmatpush1.msra.mxu0 0.0
  %907 = vmatprep.subr.mxu0 0.0
  %908 = vmatpush1.msra.mxu0 0.0
  %909 = vmatprep.subr.mxu0 0.0
  %910 = vmatpush1.msra.mxu0 0.0
  %911 = vmatprep.subr.mxu0 0.0
  %912 = vmatpush1.msra.mxu0 0.0
  %913 = vmatprep.subr.mxu0 0.0
  %914 = vmatpush1.msra.mxu0 0.0
  %915 = vmatprep.subr.mxu0 0.0
  %916 = vmatpush1.msra.mxu0 0.0
  %917 = vmatprep.subr.mxu0 0.0
  %918 = vmatpush1.msra.mxu0 0.0
  %919 = vmatprep.mubr.f32.mxu0 0.0
  %920 = vmatmul.mubr.f32.gmra.mrb[0].mxu0 %v782
  %v921 = vpop.f32.mrb[0].mxu0
  %v922 = vadd.f32 0.0, %v921
  %v923 = vpop.f32.mrb[0].mxu0
  %v924 = vadd.f32 0.0, %v923
  %925 = vdwg.mxu0
  %v926 = vadd.f32 %v777, %v851
  %v927 = vadd.f32 %v778, %v853
  %v928 = vadd.f32 %v779, %v922
  %v929 = vadd.f32 %v780, %v924
  %v930 = vxor.u32 %v926, 2147483648
  %v931 = vxor.u32 %v927, 2147483648
  %v932 = vxor.u32 %v928, 2147483648
  %v933 = vmul.f32 %v930, 1.442695
  %v934 = vpow.pop %v933
  %v935 = vmul.f32 %v931, 1.442695
  %v936 = vpow.pop %v935
  %v937 = vmul.f32 %v932, 1.442695
  %v938 = vpow.pop %v937
  %v939 = vadd.f32 %v934, 1.0
  %v940 = vadd.f32 %v936, 1.0
  %v941 = vadd.f32 %v938, 1.0
  %v942 = vrcp.pop %v939
  %v943 = vmul.f32 1.0, %v942
  %v944 = vrcp.pop %v940
  %v945 = vmul.f32 1.0, %v944
  %v946 = vrcp.pop %v941
  %v947 = vmul.f32 1.0, %v946
  %v948 = vtanh.pop %v929
  %v949 = vmul.f32 %v945, %v773
  %v950 = vmul.f32 %v943, %v948
  %v951 = vadd.f32 %v949, %v950
  %v952 = vtanh.pop %v951
  %v953 = vmul.f32 %v947, %v952
  %954 = vst.msk [vmem:[#allocation5 + $0x10] sm:$0xff] %vm424, %v953
  %v955 = vld [vmem:[#allocation4 + $0x60] sm:$0xff]
  %v956 = vld [vmem:[#allocation4 + $0x68] sm:$0xff]
  %v957 = vld [vmem:[#allocation4 + $0x70] sm:$0xff]
  %v958 = vld [vmem:[#allocation4 + $0x78] sm:$0xff]
  %v960 = vsel %vm424, %v953, 0
  %962 = vmatprep.subr.mxu0 %v403
  %963 = vmatpush1.msra.mxu0 %v402
  %964 = vmatprep.subr.mxu0 %v407
  %965 = vmatpush1.msra.mxu0 %v406
  %966 = vmatprep.subr.mxu0 %v411
  %967 = vmatpush1.msra.mxu0 %v410
  %968 = vmatprep.subr.mxu0 %v415
  %969 = vmatpush1.msra.mxu0 %v414
  %970 = vmatprep.subr.mxu0 0.0
  %971 = vmatpush1.msra.mxu0 0.0
  %972 = vmatprep.subr.mxu0 0.0
  %973 = vmatpush1.msra.mxu0 0.0
  %974 = vmatprep.subr.mxu0 0.0
  %975 = vmatpush1.msra.mxu0 0.0
  %976 = vmatprep.subr.mxu0 0.0
  %977 = vmatpush1.msra.mxu0 0.0
  %978 = vmatprep.subr.mxu0 0.0
  %979 = vmatpush1.msra.mxu0 0.0
  %980 = vmatprep.subr.mxu0 0.0
  %981 = vmatpush1.msra.mxu0 0.0
  %982 = vmatprep.subr.mxu0 0.0
  %983 = vmatpush1.msra.mxu0 0.0
  %984 = vmatprep.subr.mxu0 0.0
  %985 = vmatpush1.msra.mxu0 0.0
  %986 = vmatprep.subr.mxu0 0.0
  %987 = vmatpush1.msra.mxu0 0.0
  %988 = vmatprep.subr.mxu0 0.0
  %989 = vmatpush1.msra.mxu0 0.0
  %990 = vmatprep.subr.mxu0 0.0
  %991 = vmatpush1.msra.mxu0 0.0
  %992 = vmatprep.subr.mxu0 0.0
  %993 = vmatpush1.msra.mxu0 0.0
  %994 = vmatprep.subr.mxu0 0.0
  %995 = vmatpush1.msra.mxu0 0.0
  %996 = vmatprep.subr.mxu0 0.0
  %997 = vmatpush1.msra.mxu0 0.0
  %998 = vmatprep.subr.mxu0 0.0
  %999 = vmatpush1.msra.mxu0 0.0
  %1000 = vmatprep.subr.mxu0 0.0
  %1001 = vmatpush1.msra.mxu0 0.0
  %1002 = vmatprep.subr.mxu0 0.0
  %1003 = vmatpush1.msra.mxu0 0.0
  %1004 = vmatprep.subr.mxu0 0.0
  %1005 = vmatpush1.msra.mxu0 0.0
  %1006 = vmatprep.subr.mxu0 0.0
  %1007 = vmatpush1.msra.mxu0 0.0
  %1008 = vmatprep.subr.mxu0 0.0
  %1009 = vmatpush1.msra.mxu0 0.0
  %1010 = vmatprep.subr.mxu0 0.0
  %1011 = vmatpush1.msra.mxu0 0.0
  %1012 = vmatprep.subr.mxu0 0.0
  %1013 = vmatpush1.msra.mxu0 0.0
  %1014 = vmatprep.subr.mxu0 0.0
  %1015 = vmatpush1.msra.mxu0 0.0
  %1016 = vmatprep.subr.mxu0 0.0
  %1017 = vmatpush1.msra.mxu0 0.0
  %1018 = vmatprep.subr.mxu0 0.0
  %1019 = vmatpush1.msra.mxu0 0.0
  %1020 = vmatprep.subr.mxu0 0.0
  %1021 = vmatpush1.msra.mxu0 0.0
  %1022 = vmatprep.subr.mxu0 0.0
  %1023 = vmatpush1.msra.mxu0 0.0
  %1024 = vmatprep.subr.mxu0 0.0
  %1025 = vmatpush1.msra.mxu0 0.0
  %1026 = vmatprep.mubr.f32.mxu0 0.0
  %1027 = vmatmul.mubr.f32.gmra.mrb[0].mxu0 %v960
  %v1028 = vpop.f32.mrb[0].mxu0
  %v1029 = vadd.f32 0.0, %v1028
  %v1030 = vpop.f32.mrb[0].mxu0
  %v1031 = vadd.f32 0.0, %v1030
  %1032 = vdwg.mxu0
  %1033 = vmatprep.subr.mxu0 %v405
  %1034 = vmatpush1.msra.mxu0 %v404
  %1035 = vmatprep.subr.mxu0 %v409
  %1036 = vmatpush1.msra.mxu0 %v408
  %1037 = vmatprep.subr.mxu0 %v413
  %1038 = vmatpush1.msra.mxu0 %v412
  %1039 = vmatprep.subr.mxu0 %v417
  %1040 = vmatpush1.msra.mxu0 %v416
  %1041 = vmatprep.subr.mxu0 0.0
  %1042 = vmatpush1.msra.mxu0 0.0
  %1043 = vmatprep.subr.mxu0 0.0
  %1044 = vmatpush1.msra.mxu0 0.0
  %1045 = vmatprep.subr.mxu0 0.0
  %1046 = vmatpush1.msra.mxu0 0.0
  %1047 = vmatprep.subr.mxu0 0.0
  %1048 = vmatpush1.msra.mxu0 0.0
  %1049 = vmatprep.subr.mxu0 0.0
  %1050 = vmatpush1.msra.mxu0 0.0
  %1051 = vmatprep.subr.mxu0 0.0
  %1052 = vmatpush1.msra.mxu0 0.0
  %1053 = vmatprep.subr.mxu0 0.0
  %1054 = vmatpush1.msra.mxu0 0.0
  %1055 = vmatprep.subr.mxu0 0.0
  %1056 = vmatpush1.msra.mxu0 0.0
  %1057 = vmatprep.subr.mxu0 0.0
  %1058 = vmatpush1.msra.mxu0 0.0
  %1059 = vmatprep.subr.mxu0 0.0
  %1060 = vmatpush1.msra.mxu0 0.0
  %1061 = vmatprep.subr.mxu0 0.0
  %1062 = vmatpush1.msra.mxu0 0.0
  %1063 = vmatprep.subr.mxu0 0.0
  %1064 = vmatpush1.msra.mxu0 0.0
  %1065 = vmatprep.subr.mxu0 0.0
  %1066 = vmatpush1.msra.mxu0 0.0
  %1067 = vmatprep.subr.mxu0 0.0
  %1068 = vmatpush1.msra.mxu0 0.0
  %1069 = vmatprep.subr.mxu0 0.0
  %1070 = vmatpush1.msra.mxu0 0.0
  %1071 = vmatprep.subr.mxu0 0.0
  %1072 = vmatpush1.msra.mxu0 0.0
  %1073 = vmatprep.subr.mxu0 0.0
  %1074 = vmatpush1.msra.mxu0 0.0
  %1075 = vmatprep.subr.mxu0 0.0
  %1076 = vmatpush1.msra.mxu0 0.0
  %1077 = vmatprep.subr.mxu0 0.0
  %1078 = vmatpush1.msra.mxu0 0.0
  %1079 = vmatprep.subr.mxu0 0.0
  %1080 = vmatpush1.msra.mxu0 0.0
  %1081 = vmatprep.subr.mxu0 0.0
  %1082 = vmatpush1.msra.mxu0 0.0
  %1083 = vmatprep.subr.mxu0 0.0
  %1084 = vmatpush1.msra.mxu0 0.0
  %1085 = vmatprep.subr.mxu0 0.0
  %1086 = vmatpush1.msra.mxu0 0.0
  %1087 = vmatprep.subr.mxu0 0.0
  %1088 = vmatpush1.msra.mxu0 0.0
  %1089 = vmatprep.subr.mxu0 0.0
  %1090 = vmatpush1.msra.mxu0 0.0
  %1091 = vmatprep.subr.mxu0 0.0
  %1092 = vmatpush1.msra.mxu0 0.0
  %1093 = vmatprep.subr.mxu0 0.0
  %1094 = vmatpush1.msra.mxu0 0.0
  %1095 = vmatprep.subr.mxu0 0.0
  %1096 = vmatpush1.msra.mxu0 0.0
  %1097 = vmatprep.mubr.f32.mxu0 0.0
  %1098 = vmatmul.mubr.f32.gmra.mrb[0].mxu0 %v960
  %v1099 = vpop.f32.mrb[0].mxu0
  %v1100 = vadd.f32 0.0, %v1099
  %v1101 = vpop.f32.mrb[0].mxu0
  %v1102 = vadd.f32 0.0, %v1101
  %1103 = vdwg.mxu0
  %v1104 = vadd.f32 %v955, %v1029
  %v1105 = vadd.f32 %v956, %v1031
  %v1106 = vadd.f32 %v957, %v1100
  %v1107 = vadd.f32 %v958, %v1102
  %v1108 = vxor.u32 %v1104, 2147483648
  %v1109 = vxor.u32 %v1105, 2147483648
  %v1110 = vxor.u32 %v1106, 2147483648
  %v1111 = vmul.f32 %v1108, 1.442695
  %v1112 = vpow.pop %v1111
  %v1113 = vmul.f32 %v1109, 1.442695
  %v1114 = vpow.pop %v1113
  %v1115 = vmul.f32 %v1110, 1.442695
  %v1116 = vpow.pop %v1115
  %v1117 = vadd.f32 %v1112, 1.0
  %v1118 = vadd.f32 %v1114, 1.0
  %v1119 = vadd.f32 %v1116, 1.0
  %v1120 = vrcp.pop %v1117
  %v1121 = vmul.f32 1.0, %v1120
  %v1122 = vrcp.pop %v1118
  %v1123 = vmul.f32 1.0, %v1122
  %v1124 = vrcp.pop %v1119
  %v1125 = vmul.f32 1.0, %v1124
  %v1126 = vtanh.pop %v1107
  %v1127 = vmul.f32 %v1123, %v951
  %v1128 = vmul.f32 %v1121, %v1126
  %v1129 = vadd.f32 %v1127, %v1128
  %v1130 = vtanh.pop %v1129
  %v1131 = vmul.f32 %v1125, %v1130
  %1132 = vst.msk [vmem:[#allocation5 + $0x18] sm:$0xff] %vm424, %v1131
  %v1133 = vld [vmem:[#allocation4 + $0x80] sm:$0xff]
  %v1134 = vld [vmem:[#allocation4 + $0x88] sm:$0xff]
  %v1135 = vld [vmem:[#allocation4 + $0x90] sm:$0xff]
  %v1136 = vld [vmem:[#allocation4 + $0x98] sm:$0xff]
  %v1138 = vsel %vm424, %v1131, 0
  %1140 = vmatprep.subr.mxu0 %v403
  %1141 = vmatpush1.msra.mxu0 %v402
  %1142 = vmatprep.subr.mxu0 %v407
  %1143 = vmatpush1.msra.mxu0 %v406
  %1144 = vmatprep.subr.mxu0 %v411
  %1145 = vmatpush1.msra.mxu0 %v410
  %1146 = vmatprep.subr.mxu0 %v415
  %1147 = vmatpush1.msra.mxu0 %v414
  %1148 = vmatprep.subr.mxu0 0.0
  %1149 = vmatpush1.msra.mxu0 0.0
  %1150 = vmatprep.subr.mxu0 0.0
  %1151 = vmatpush1.msra.mxu0 0.0
  %1152 = vmatprep.subr.mxu0 0.0
  %1153 = vmatpush1.msra.mxu0 0.0
  %1154 = vmatprep.subr.mxu0 0.0
  %1155 = vmatpush1.msra.mxu0 0.0
  %1156 = vmatprep.subr.mxu0 0.0
  %1157 = vmatpush1.msra.mxu0 0.0
  %1158 = vmatprep.subr.mxu0 0.0
  %1159 = vmatpush1.msra.mxu0 0.0
  %1160 = vmatprep.subr.mxu0 0.0
  %1161 = vmatpush1.msra.mxu0 0.0
  %1162 = vmatprep.subr.mxu0 0.0
  %1163 = vmatpush1.msra.mxu0 0.0
  %1164 = vmatprep.subr.mxu0 0.0
  %1165 = vmatpush1.msra.mxu0 0.0
  %1166 = vmatprep.subr.mxu0 0.0
  %1167 = vmatpush1.msra.mxu0 0.0
  %1168 = vmatprep.subr.mxu0 0.0
  %1169 = vmatpush1.msra.mxu0 0.0
  %1170 = vmatprep.subr.mxu0 0.0
  %1171 = vmatpush1.msra.mxu0 0.0
  %1172 = vmatprep.subr.mxu0 0.0
  %1173 = vmatpush1.msra.mxu0 0.0
  %1174 = vmatprep.subr.mxu0 0.0
  %1175 = vmatpush1.msra.mxu0 0.0
  %1176 = vmatprep.subr.mxu0 0.0
  %1177 = vmatpush1.msra.mxu0 0.0
  %1178 = vmatprep.subr.mxu0 0.0
  %1179 = vmatpush1.msra.mxu0 0.0
  %1180 = vmatprep.subr.mxu0 0.0
  %1181 = vmatpush1.msra.mxu0 0.0
  %1182 = vmatprep.subr.mxu0 0.0
  %1183 = vmatpush1.msra.mxu0 0.0
  %1184 = vmatprep.subr.mxu0 0.0
  %1185 = vmatpush1.msra.mxu0 0.0
  %1186 = vmatprep.subr.mxu0 0.0
  %1187 = vmatpush1.msra.mxu0 0.0
  %1188 = vmatprep.subr.mxu0 0.0
  %1189 = vmatpush1.msra.mxu0 0.0
  %1190 = vmatprep.subr.mxu0 0.0
  %1191 = vmatpush1.msra.mxu0 0.0
  %1192 = vmatprep.subr.mxu0 0.0
  %1193 = vmatpush1.msra.mxu0 0.0
  %1194 = vmatprep.subr.mxu0 0.0
  %1195 = vmatpush1.msra.mxu0 0.0
  %1196 = vmatprep.subr.mxu0 0.0
  %1197 = vmatpush1.msra.mxu0 0.0
  %1198 = vmatprep.subr.mxu0 0.0
  %1199 = vmatpush1.msra.mxu0 0.0
  %1200 = vmatprep.subr.mxu0 0.0
  %1201 = vmatpush1.msra.mxu0 0.0
  %1202 = vmatprep.subr.mxu0 0.0
  %1203 = vmatpush1.msra.mxu0 0.0
  %1204 = vmatprep.mubr.f32.mxu0 0.0
  %1205 = vmatmul.mubr.f32.gmra.mrb[0].mxu0 %v1138
  %v1206 = vpop.f32.mrb[0].mxu0
  %v1207 = vadd.f32 0.0, %v1206
  %v1208 = vpop.f32.mrb[0].mxu0
  %v1209 = vadd.f32 0.0, %v1208
  %1210 = vdwg.mxu0
  %1211 = vmatprep.subr.mxu0 %v405
  %1212 = vmatpush1.msra.mxu0 %v404
  %1213 = vmatprep.subr.mxu0 %v409
  %1214 = vmatpush1.msra.mxu0 %v408
  %1215 = vmatprep.subr.mxu0 %v413
  %1216 = vmatpush1.msra.mxu0 %v412
  %1217 = vmatprep.subr.mxu0 %v417
  %1218 = vmatpush1.msra.mxu0 %v416
  %1219 = vmatprep.subr.mxu0 0.0
  %1220 = vmatpush1.msra.mxu0 0.0
  %1221 = vmatprep.subr.mxu0 0.0
  %1222 = vmatpush1.msra.mxu0 0.0
  %1223 = vmatprep.subr.mxu0 0.0
  %1224 = vmatpush1.msra.mxu0 0.0
  %1225 = vmatprep.subr.mxu0 0.0
  %1226 = vmatpush1.msra.mxu0 0.0
  %1227 = vmatprep.subr.mxu0 0.0
  %1228 = vmatpush1.msra.mxu0 0.0
  %1229 = vmatprep.subr.mxu0 0.0
  %1230 = vmatpush1.msra.mxu0 0.0
  %1231 = vmatprep.subr.mxu0 0.0
  %1232 = vmatpush1.msra.mxu0 0.0
  %1233 = vmatprep.subr.mxu0 0.0
  %1234 = vmatpush1.msra.mxu0 0.0
  %1235 = vmatprep.subr.mxu0 0.0
  %1236 = vmatpush1.msra.mxu0 0.0
  %1237 = vmatprep.subr.mxu0 0.0
  %1238 = vmatpush1.msra.mxu0 0.0
  %1239 = vmatprep.subr.mxu0 0.0
  %1240 = vmatpush1.msra.mxu0 0.0
  %1241 = vmatprep.subr.mxu0 0.0
  %1242 = vmatpush1.msra.mxu0 0.0
  %1243 = vmatprep.subr.mxu0 0.0
  %1244 = vmatpush1.msra.mxu0 0.0
  %1245 = vmatprep.subr.mxu0 0.0
  %1246 = vmatpush1.msra.mxu0 0.0
  %1247 = vmatprep.subr.mxu0 0.0
  %1248 = vmatpush1.msra.mxu0 0.0
  %1249 = vmatprep.subr.mxu0 0.0
  %1250 = vmatpush1.msra.mxu0 0.0
  %1251 = vmatprep.subr.mxu0 0.0
  %1252 = vmatpush1.msra.mxu0 0.0
  %1253 = vmatprep.subr.mxu0 0.0
  %1254 = vmatpush1.msra.mxu0 0.0
  %1255 = vmatprep.subr.mxu0 0.0
  %1256 = vmatpush1.msra.mxu0 0.0
  %1257 = vmatprep.subr.mxu0 0.0
  %1258 = vmatpush1.msra.mxu0 0.0
  %1259 = vmatprep.subr.mxu0 0.0
  %1260 = vmatpush1.msra.mxu0 0.0
  %1261 = vmatprep.subr.mxu0 0.0
  %1262 = vmatpush1.msra.mxu0 0.0
  %1263 = vmatprep.subr.mxu0 0.0
  %1264 = vmatpush1.msra.mxu0 0.0
  %1265 = vmatprep.subr.mxu0 0.0
  %1266 = vmatpush1.msra.mxu0 0.0
  %1267 = vmatprep.subr.mxu0 0.0
  %1268 = vmatpush1.msra.mxu0 0.0
  %1269 = vmatprep.subr.mxu0 0.0
  %1270 = vmatpush1.msra.mxu0 0.0
  %1271 = vmatprep.subr.mxu0 0.0
  %1272 = vmatpush1.msra.mxu0 0.0
  %1273 = vmatprep.subr.mxu0 0.0
  %1274 = vmatpush1.msra.mxu0 0.0
  %1275 = vmatprep.mubr.f32.mxu0 0.0
  %1276 = vmatmul.mubr.f32.gmra.mrb[0].mxu0 %v1138
  %v1277 = vpop.f32.mrb[0].mxu0
  %v1278 = vadd.f32 0.0, %v1277
  %v1279 = vpop.f32.mrb[0].mxu0
  %v1280 = vadd.f32 0.0, %v1279
  %1281 = vdwg.mxu0
  %v1282 = vadd.f32 %v1133, %v1207
  %v1283 = vadd.f32 %v1134, %v1209
  %v1284 = vadd.f32 %v1135, %v1278
  %v1285 = vadd.f32 %v1136, %v1280
  %v1286 = vxor.u32 %v1282, 2147483648
  %v1287 = vxor.u32 %v1283, 2147483648
  %v1288 = vxor.u32 %v1284, 2147483648
  %v1289 = vmul.f32 %v1286, 1.442695
  %v1290 = vpow.pop %v1289
  %v1291 = vmul.f32 %v1287, 1.442695
  %v1292 = vpow.pop %v1291
  %v1293 = vmul.f32 %v1288, 1.442695
  %v1294 = vpow.pop %v1293
  %v1295 = vadd.f32 %v1290, 1.0
  %v1296 = vadd.f32 %v1292, 1.0
  %v1297 = vadd.f32 %v1294, 1.0
  %v1298 = vrcp.pop %v1295
  %v1299 = vmul.f32 1.0, %v1298
  %v1300 = vrcp.pop %v1296
  %v1301 = vmul.f32 1.0, %v1300
  %v1302 = vrcp.pop %v1297
  %v1303 = vmul.f32 1.0, %v1302
  %v1304 = vtanh.pop %v1285
  %v1305 = vmul.f32 %v1301, %v1129
  %v1306 = vmul.f32 %v1299, %v1304
  %v1307 = vadd.f32 %v1305, %v1306
  %v1308 = vtanh.pop %v1307
  %v1309 = vmul.f32 %v1303, %v1308
  %1310 = vst.msk [vmem:[#allocation5 + $0x20] sm:$0xff] %vm424, %v1309
  %v1311 = vld [vmem:[#allocation4 + $0xa0] sm:$0xff]
  %v1312 = vld [vmem:[#allocation4 + $0xa8] sm:$0xff]
  %v1313 = vld [vmem:[#allocation4 + $0xb0] sm:$0xff]
  %v1314 = vld [vmem:[#allocation4 + $0xb8] sm:$0xff]
  %v1316 = vsel %vm424, %v1309, 0
  %1318 = vmatprep.subr.mxu0 %v403
  %1319 = vmatpush1.msra.mxu0 %v402
  %1320 = vmatprep.subr.mxu0 %v407
  %1321 = vmatpush1.msra.mxu0 %v406
  %1322 = vmatprep.subr.mxu0 %v411
  %1323 = vmatpush1.msra.mxu0 %v410
  %1324 = vmatprep.subr.mxu0 %v415
  %1325 = vmatpush1.msra.mxu0 %v414
  %1326 = vmatprep.subr.mxu0 0.0
  %1327 = vmatpush1.msra.mxu0 0.0
  %1328 = vmatprep.subr.mxu0 0.0
  %1329 = vmatpush1.msra.mxu0 0.0
  %1330 = vmatprep.subr.mxu0 0.0
  %1331 = vmatpush1.msra.mxu0 0.0
  %1332 = vmatprep.subr.mxu0 0.0
  %1333 = vmatpush1.msra.mxu0 0.0
  %1334 = vmatprep.subr.mxu0 0.0
  %1335 = vmatpush1.msra.mxu0 0.0
  %1336 = vmatprep.subr.mxu0 0.0
  %1337 = vmatpush1.msra.mxu0 0.0
  %1338 = vmatprep.subr.mxu0 0.0
  %1339 = vmatpush1.msra.mxu0 0.0
  %1340 = vmatprep.subr.mxu0 0.0
  %1341 = vmatpush1.msra.mxu0 0.0
  %1342 = vmatprep.subr.mxu0 0.0
  %1343 = vmatpush1.msra.mxu0 0.0
  %1344 = vmatprep.subr.mxu0 0.0
  %1345 = vmatpush1.msra.mxu0 0.0
  %1346 = vmatprep.subr.mxu0 0.0
  %1347 = vmatpush1.msra.mxu0 0.0
  %1348 = vmatprep.subr.mxu0 0.0
  %1349 = vmatpush1.msra.mxu0 0.0
  %1350 = vmatprep.subr.mxu0 0.0
  %1351 = vmatpush1.msra.mxu0 0.0
  %1352 = vmatprep.subr.mxu0 0.0
  %1353 = vmatpush1.msra.mxu0 0.0
  %1354 = vmatprep.subr.mxu0 0.0
  %1355 = vmatpush1.msra.mxu0 0.0
  %1356 = vmatprep.subr.mxu0 0.0
  %1357 = vmatpush1.msra.mxu0 0.0
  %1358 = vmatprep.subr.mxu0 0.0
  %1359 = vmatpush1.msra.mxu0 0.0
  %1360 = vmatprep.subr.mxu0 0.0
  %1361 = vmatpush1.msra.mxu0 0.0
  %1362 = vmatprep.subr.mxu0 0.0
  %1363 = vmatpush1.msra.mxu0 0.0
  %1364 = vmatprep.subr.mxu0 0.0
  %1365 = vmatpush1.msra.mxu0 0.0
  %1366 = vmatprep.subr.mxu0 0.0
  %1367 = vmatpush1.msra.mxu0 0.0
  %1368 = vmatprep.subr.mxu0 0.0
  %1369 = vmatpush1.msra.mxu0 0.0
  %1370 = vmatprep.subr.mxu0 0.0
  %1371 = vmatpush1.msra.mxu0 0.0
  %1372 = vmatprep.subr.mxu0 0.0
  %1373 = vmatpush1.msra.mxu0 0.0
  %1374 = vmatprep.subr.mxu0 0.0
  %1375 = vmatpush1.msra.mxu0 0.0
  %1376 = vmatprep.subr.mxu0 0.0
  %1377 = vmatpush1.msra.mxu0 0.0
  %1378 = vmatprep.subr.mxu0 0.0
  %1379 = vmatpush1.msra.mxu0 0.0
  %1380 = vmatprep.subr.mxu0 0.0
  %1381 = vmatpush1.msra.mxu0 0.0
  %1382 = vmatprep.mubr.f32.mxu0 0.0
  %1383 = vmatmul.mubr.f32.gmra.mrb[0].mxu0 %v1316
  %v1384 = vpop.f32.mrb[0].mxu0
  %v1385 = vadd.f32 0.0, %v1384
  %v1386 = vpop.f32.mrb[0].mxu0
  %v1387 = vadd.f32 0.0, %v1386
  %1388 = vdwg.mxu0
  %1389 = vmatprep.subr.mxu0 %v405
  %1390 = vmatpush1.msra.mxu0 %v404
  %1391 = vmatprep.subr.mxu0 %v409
  %1392 = vmatpush1.msra.mxu0 %v408
  %1393 = vmatprep.subr.mxu0 %v413
  %1394 = vmatpush1.msra.mxu0 %v412
  %1395 = vmatprep.subr.mxu0 %v417
  %1396 = vmatpush1.msra.mxu0 %v416
  %1397 = vmatprep.subr.mxu0 0.0
  %1398 = vmatpush1.msra.mxu0 0.0
  %1399 = vmatprep.subr.mxu0 0.0
  %1400 = vmatpush1.msra.mxu0 0.0
  %1401 = vmatprep.subr.mxu0 0.0
  %1402 = vmatpush1.msra.mxu0 0.0
  %1403 = vmatprep.subr.mxu0 0.0
  %1404 = vmatpush1.msra.mxu0 0.0
  %1405 = vmatprep.subr.mxu0 0.0
  %1406 = vmatpush1.msra.mxu0 0.0
  %1407 = vmatprep.subr.mxu0 0.0
  %1408 = vmatpush1.msra.mxu0 0.0
  %1409 = vmatprep.subr.mxu0 0.0
  %1410 = vmatpush1.msra.mxu0 0.0
  %1411 = vmatprep.subr.mxu0 0.0
  %1412 = vmatpush1.msra.mxu0 0.0
  %1413 = vmatprep.subr.mxu0 0.0
  %1414 = vmatpush1.msra.mxu0 0.0
  %1415 = vmatprep.subr.mxu0 0.0
  %1416 = vmatpush1.msra.mxu0 0.0
  %1417 = vmatprep.subr.mxu0 0.0
  %1418 = vmatpush1.msra.mxu0 0.0
  %1419 = vmatprep.subr.mxu0 0.0
  %1420 = vmatpush1.msra.mxu0 0.0
  %1421 = vmatprep.subr.mxu0 0.0
  %1422 = vmatpush1.msra.mxu0 0.0
  %1423 = vmatprep.subr.mxu0 0.0
  %1424 = vmatpush1.msra.mxu0 0.0
  %1425 = vmatprep.subr.mxu0 0.0
  %1426 = vmatpush1.msra.mxu0 0.0
  %1427 = vmatprep.subr.mxu0 0.0
  %1428 = vmatpush1.msra.mxu0 0.0
  %1429 = vmatprep.subr.mxu0 0.0
  %1430 = vmatpush1.msra.mxu0 0.0
  %1431 = vmatprep.subr.mxu0 0.0
  %1432 = vmatpush1.msra.mxu0 0.0
  %1433 = vmatprep.subr.mxu0 0.0
  %1434 = vmatpush1.msra.mxu0 0.0
  %1435 = vmatprep.subr.mxu0 0.0
  %1436 = vmatpush1.msra.mxu0 0.0
  %1437 = vmatprep.subr.mxu0 0.0
  %1438 = vmatpush1.msra.mxu0 0.0
  %1439 = vmatprep.subr.mxu0 0.0
  %1440 = vmatpush1.msra.mxu0 0.0
  %1441 = vmatprep.subr.mxu0 0.0
  %1442 = vmatpush1.msra.mxu0 0.0
  %1443 = vmatprep.subr.mxu0 0.0
  %1444 = vmatpush1.msra.mxu0 0.0
  %1445 = vmatprep.subr.mxu0 0.0
  %1446 = vmatpush1.msra.mxu0 0.0
  %1447 = vmatprep.subr.mxu0 0.0
  %1448 = vmatpush1.msra.mxu0 0.0
  %1449 = vmatprep.subr.mxu0 0.0
  %1450 = vmatpush1.msra.mxu0 0.0
  %1451 = vmatprep.subr.mxu0 0.0
  %1452 = vmatpush1.msra.mxu0 0.0
  %1453 = vmatprep.mubr.f32.mxu0 0.0
  %1454 = vmatmul.mubr.f32.gmra.mrb[0].mxu0 %v1316
  %v1455 = vpop.f32.mrb[0].mxu0
  %v1456 = vadd.f32 0.0, %v1455
  %v1457 = vpop.f32.mrb[0].mxu0
  %v1458 = vadd.f32 0.0, %v1457
  %1459 = vdwg.mxu0
  %v1460 = vadd.f32 %v1311, %v1385
  %v1461 = vadd.f32 %v1312, %v1387
  %v1462 = vadd.f32 %v1313, %v1456
  %v1463 = vadd.f32 %v1314, %v1458
  %v1464 = vxor.u32 %v1460, 2147483648
  %v1465 = vxor.u32 %v1461, 2147483648
  %v1466 = vxor.u32 %v1462, 2147483648
  %v1467 = vmul.f32 %v1464, 1.442695
  %v1468 = vpow.pop %v1467
  %v1469 = vmul.f32 %v1465, 1.442695
  %v1470 = vpow.pop %v1469
  %v1471 = vmul.f32 %v1466, 1.442695
  %v1472 = vpow.pop %v1471
  %v1473 = vadd.f32 %v1468, 1.0
  %v1474 = vadd.f32 %v1470, 1.0
  %v1475 = vadd.f32 %v1472, 1.0
  %v1476 = vrcp.pop %v1473
  %v1477 = vmul.f32 1.0, %v1476
  %v1478 = vrcp.pop %v1474
  %v1479 = vmul.f32 1.0, %v1478
  %v1480 = vrcp.pop %v1475
  %v1481 = vmul.f32 1.0, %v1480
  %v1482 = vtanh.pop %v1463
  %v1483 = vmul.f32 %v1479, %v1307
  %v1484 = vmul.f32 %v1477, %v1482
  %v1485 = vadd.f32 %v1483, %v1484
  %v1486 = vtanh.pop %v1485
  %v1487 = vmul.f32 %v1481, %v1486
  %1488 = vst.msk [vmem:[#allocation5 + $0x28] sm:$0xff] %vm424, %v1487
  %v1489 = vld [vmem:[#allocation4 + $0xc0] sm:$0xff]
  %v1490 = vld [vmem:[#allocation4 + $0xc8] sm:$0xff]
  %v1491 = vld [vmem:[#allocation4 + $0xd0] sm:$0xff]
  %v1492 = vld [vmem:[#allocation4 + $0xd8] sm:$0xff]
  %v1494 = vsel %vm424, %v1487, 0
  %1496 = vmatprep.subr.mxu0 %v403
  %1497 = vmatpush1.msra.mxu0 %v402
  %1498 = vmatprep.subr.mxu0 %v407
  %1499 = vmatpush1.msra.mxu0 %v406
  %1500 = vmatprep.subr.mxu0 %v411
  %1501 = vmatpush1.msra.mxu0 %v410
  %1502 = vmatprep.subr.mxu0 %v415
  %1503 = vmatpush1.msra.mxu0 %v414
  %1504 = vmatprep.subr.mxu0 0.0
  %1505 = vmatpush1.msra.mxu0 0.0
  %1506 = vmatprep.subr.mxu0 0.0
  %1507 = vmatpush1.msra.mxu0 0.0
  %1508 = vmatprep.subr.mxu0 0.0
  %1509 = vmatpush1.msra.mxu0 0.0
  %1510 = vmatprep.subr.mxu0 0.0
  %1511 = vmatpush1.msra.mxu0 0.0
  %1512 = vmatprep.subr.mxu0 0.0
  %1513 = vmatpush1.msra.mxu0 0.0
  %1514 = vmatprep.subr.mxu0 0.0
  %1515 = vmatpush1.msra.mxu0 0.0
  %1516 = vmatprep.subr.mxu0 0.0
  %1517 = vmatpush1.msra.mxu0 0.0
  %1518 = vmatprep.subr.mxu0 0.0
  %1519 = vmatpush1.msra.mxu0 0.0
  %1520 = vmatprep.subr.mxu0 0.0
  %1521 = vmatpush1.msra.mxu0 0.0
  %1522 = vmatprep.subr.mxu0 0.0
  %1523 = vmatpush1.msra.mxu0 0.0
  %1524 = vmatprep.subr.mxu0 0.0
  %1525 = vmatpush1.msra.mxu0 0.0
  %1526 = vmatprep.subr.mxu0 0.0
  %1527 = vmatpush1.msra.mxu0 0.0
  %1528 = vmatprep.subr.mxu0 0.0
  %1529 = vmatpush1.msra.mxu0 0.0
  %1530 = vmatprep.subr.mxu0 0.0
  %1531 = vmatpush1.msra.mxu0 0.0
  %1532 = vmatprep.subr.mxu0 0.0
  %1533 = vmatpush1.msra.mxu0 0.0
  %1534 = vmatprep.subr.mxu0 0.0
  %1535 = vmatpush1.msra.mxu0 0.0
  %1536 = vmatprep.subr.mxu0 0.0
  %1537 = vmatpush1.msra.mxu0 0.0
  %1538 = vmatprep.subr.mxu0 0.0
  %1539 = vmatpush1.msra.mxu0 0.0
  %1540 = vmatprep.subr.mxu0 0.0
  %1541 = vmatpush1.msra.mxu0 0.0
  %1542 = vmatprep.subr.mxu0 0.0
  %1543 = vmatpush1.msra.mxu0 0.0
  %1544 = vmatprep.subr.mxu0 0.0
  %1545 = vmatpush1.msra.mxu0 0.0
  %1546 = vmatprep.subr.mxu0 0.0
  %1547 = vmatpush1.msra.mxu0 0.0
  %1548 = vmatprep.subr.mxu0 0.0
  %1549 = vmatpush1.msra.mxu0 0.0
  %1550 = vmatprep.subr.mxu0 0.0
  %1551 = vmatpush1.msra.mxu0 0.0
  %1552 = vmatprep.subr.mxu0 0.0
  %1553 = vmatpush1.msra.mxu0 0.0
  %1554 = vmatprep.subr.mxu0 0.0
  %1555 = vmatpush1.msra.mxu0 0.0
  %1556 = vmatprep.subr.mxu0 0.0
  %1557 = vmatpush1.msra.mxu0 0.0
  %1558 = vmatprep.subr.mxu0 0.0
  %1559 = vmatpush1.msra.mxu0 0.0
  %1560 = vmatprep.mubr.f32.mxu0 0.0
  %1561 = vmatmul.mubr.f32.gmra.mrb[0].mxu0 %v1494
  %v1562 = vpop.f32.mrb[0].mxu0
  %v1563 = vadd.f32 0.0, %v1562
  %v1564 = vpop.f32.mrb[0].mxu0
  %v1565 = vadd.f32 0.0, %v1564
  %1566 = vdwg.mxu0
  %1567 = vmatprep.subr.mxu0 %v405
  %1568 = vmatpush1.msra.mxu0 %v404
  %1569 = vmatprep.subr.mxu0 %v409
  %1570 = vmatpush1.msra.mxu0 %v408
  %1571 = vmatprep.subr.mxu0 %v413
  %1572 = vmatpush1.msra.mxu0 %v412
  %1573 = vmatprep.subr.mxu0 %v417
  %1574 = vmatpush1.msra.mxu0 %v416
  %1575 = vmatprep.subr.mxu0 0.0
  %1576 = vmatpush1.msra.mxu0 0.0
  %1577 = vmatprep.subr.mxu0 0.0
  %1578 = vmatpush1.msra.mxu0 0.0
  %1579 = vmatprep.subr.mxu0 0.0
  %1580 = vmatpush1.msra.mxu0 0.0
  %1581 = vmatprep.subr.mxu0 0.0
  %1582 = vmatpush1.msra.mxu0 0.0
  %1583 = vmatprep.subr.mxu0 0.0
  %1584 = vmatpush1.msra.mxu0 0.0
  %1585 = vmatprep.subr.mxu0 0.0
  %1586 = vmatpush1.msra.mxu0 0.0
  %1587 = vmatprep.subr.mxu0 0.0
  %1588 = vmatpush1.msra.mxu0 0.0
  %1589 = vmatprep.subr.mxu0 0.0
  %1590 = vmatpush1.msra.mxu0 0.0
  %1591 = vmatprep.subr.mxu0 0.0
  %1592 = vmatpush1.msra.mxu0 0.0
  %1593 = vmatprep.subr.mxu0 0.0
  %1594 = vmatpush1.msra.mxu0 0.0
  %1595 = vmatprep.subr.mxu0 0.0
  %1596 = vmatpush1.msra.mxu0 0.0
  %1597 = vmatprep.subr.mxu0 0.0
  %1598 = vmatpush1.msra.mxu0 0.0
  %1599 = vmatprep.subr.mxu0 0.0
  %1600 = vmatpush1.msra.mxu0 0.0
  %1601 = vmatprep.subr.mxu0 0.0
  %1602 = vmatpush1.msra.mxu0 0.0
  %1603 = vmatprep.subr.mxu0 0.0
  %1604 = vmatpush1.msra.mxu0 0.0
  %1605 = vmatprep.subr.mxu0 0.0
  %1606 = vmatpush1.msra.mxu0 0.0
  %1607 = vmatprep.subr.mxu0 0.0
  %1608 = vmatpush1.msra.mxu0 0.0
  %1609 = vmatprep.subr.mxu0 0.0
  %1610 = vmatpush1.msra.mxu0 0.0
  %1611 = vmatprep.subr.mxu0 0.0
  %1612 = vmatpush1.msra.mxu0 0.0
  %1613 = vmatprep.subr.mxu0 0.0
  %1614 = vmatpush1.msra.mxu0 0.0
  %1615 = vmatprep.subr.mxu0 0.0
  %1616 = vmatpush1.msra.mxu0 0.0
  %1617 = vmatprep.subr.mxu0 0.0
  %1618 = vmatpush1.msra.mxu0 0.0
  %1619 = vmatprep.subr.mxu0 0.0
  %1620 = vmatpush1.msra.mxu0 0.0
  %1621 = vmatprep.subr.mxu0 0.0
  %1622 = vmatpush1.msra.mxu0 0.0
  %1623 = vmatprep.subr.mxu0 0.0
  %1624 = vmatpush1.msra.mxu0 0.0
  %1625 = vmatprep.subr.mxu0 0.0
  %1626 = vmatpush1.msra.mxu0 0.0
  %1627 = vmatprep.subr.mxu0 0.0
  %1628 = vmatpush1.msra.mxu0 0.0
  %1629 = vmatprep.subr.mxu0 0.0
  %1630 = vmatpush1.msra.mxu0 0.0
  %1631 = vmatprep.mubr.f32.mxu0 0.0
  %1632 = vmatmul.mubr.f32.gmra.mrb[0].mxu0 %v1494
  %v1633 = vpop.f32.mrb[0].mxu0
  %v1634 = vadd.f32 0.0, %v1633
  %v1635 = vpop.f32.mrb[0].mxu0
  %v1636 = vadd.f32 0.0, %v1635
  %1637 = vdwg.mxu0
  %v1638 = vadd.f32 %v1489, %v1563
  %v1639 = vadd.f32 %v1490, %v1565
  %v1640 = vadd.f32 %v1491, %v1634
  %v1641 = vadd.f32 %v1492, %v1636
  %v1642 = vxor.u32 %v1638, 2147483648
  %v1643 = vxor.u32 %v1639, 2147483648
  %v1644 = vxor.u32 %v1640, 2147483648
  %v1645 = vmul.f32 %v1642, 1.442695
  %v1646 = vpow.pop %v1645
  %v1647 = vmul.f32 %v1643, 1.442695
  %v1648 = vpow.pop %v1647
  %v1649 = vmul.f32 %v1644, 1.442695
  %v1650 = vpow.pop %v1649
  %v1651 = vadd.f32 %v1646, 1.0
  %v1652 = vadd.f32 %v1648, 1.0
  %v1653 = vadd.f32 %v1650, 1.0
  %v1654 = vrcp.pop %v1651
  %v1655 = vmul.f32 1.0, %v1654
  %v1656 = vrcp.pop %v1652
  %v1657 = vmul.f32 1.0, %v1656
  %v1658 = vrcp.pop %v1653
  %v1659 = vmul.f32 1.0, %v1658
  %v1660 = vtanh.pop %v1641
  %v1661 = vmul.f32 %v1657, %v1485
  %v1662 = vmul.f32 %v1655, %v1660
  %v1663 = vadd.f32 %v1661, %v1662
  %v1664 = vtanh.pop %v1663
  %v1665 = vmul.f32 %v1659, %v1664
  %1666 = vst.msk [vmem:[#allocation5 + $0x30] sm:$0xff] %vm424, %v1665
  %v1667 = vld [vmem:[#allocation4 + $0xe0] sm:$0xff]
  %v1668 = vld [vmem:[#allocation4 + $0xe8] sm:$0xff]
  %v1669 = vld [vmem:[#allocation4 + $0xf0] sm:$0xff]
  %v1670 = vld [vmem:[#allocation4 + $0xf8] sm:$0xff]
  %v1672 = vsel %vm424, %v1665, 0
  %1674 = vmatprep.subr.mxu0 %v403
  %1675 = vmatpush1.msra.mxu0 %v402
  %1676 = vmatprep.subr.mxu0 %v407
  %1677 = vmatpush1.msra.mxu0 %v406
  %1678 = vmatprep.subr.mxu0 %v411
  %1679 = vmatpush1.msra.mxu0 %v410
  %1680 = vmatprep.subr.mxu0 %v415
  %1681 = vmatpush1.msra.mxu0 %v414
  %1682 = vmatprep.subr.mxu0 0.0
  %1683 = vmatpush1.msra.mxu0 0.0
  %1684 = vmatprep.subr.mxu0 0.0
  %1685 = vmatpush1.msra.mxu0 0.0
  %1686 = vmatprep.subr.mxu0 0.0
  %1687 = vmatpush1.msra.mxu0 0.0
  %1688 = vmatprep.subr.mxu0 0.0
  %1689 = vmatpush1.msra.mxu0 0.0
  %1690 = vmatprep.subr.mxu0 0.0
  %1691 = vmatpush1.msra.mxu0 0.0
  %1692 = vmatprep.subr.mxu0 0.0
  %1693 = vmatpush1.msra.mxu0 0.0
  %1694 = vmatprep.subr.mxu0 0.0
  %1695 = vmatpush1.msra.mxu0 0.0
  %1696 = vmatprep.subr.mxu0 0.0
  %1697 = vmatpush1.msra.mxu0 0.0
  %1698 = vmatprep.subr.mxu0 0.0
  %1699 = vmatpush1.msra.mxu0 0.0
  %1700 = vmatprep.subr.mxu0 0.0
  %1701 = vmatpush1.msra.mxu0 0.0
  %1702 = vmatprep.subr.mxu0 0.0
  %1703 = vmatpush1.msra.mxu0 0.0
  %1704 = vmatprep.subr.mxu0 0.0
  %1705 = vmatpush1.msra.mxu0 0.0
  %1706 = vmatprep.subr.mxu0 0.0
  %1707 = vmatpush1.msra.mxu0 0.0
  %1708 = vmatprep.subr.mxu0 0.0
  %1709 = vmatpush1.msra.mxu0 0.0
  %1710 = vmatprep.subr.mxu0 0.0
  %1711 = vmatpush1.msra.mxu0 0.0
  %1712 = vmatprep.subr.mxu0 0.0
  %1713 = vmatpush1.msra.mxu0 0.0
  %1714 = vmatprep.subr.mxu0 0.0
  %1715 = vmatpush1.msra.mxu0 0.0
  %1716 = vmatprep.subr.mxu0 0.0
  %1717 = vmatpush1.msra.mxu0 0.0
  %1718 = vmatprep.subr.mxu0 0.0
  %1719 = vmatpush1.msra.mxu0 0.0
  %1720 = vmatprep.subr.mxu0 0.0
  %1721 = vmatpush1.msra.mxu0 0.0
  %1722 = vmatprep.subr.mxu0 0.0
  %1723 = vmatpush1.msra.mxu0 0.0
  %1724 = vmatprep.subr.mxu0 0.0
  %1725 = vmatpush1.msra.mxu0 0.0
  %1726 = vmatprep.subr.mxu0 0.0
  %1727 = vmatpush1.msra.mxu0 0.0
  %1728 = vmatprep.subr.mxu0 0.0
  %1729 = vmatpush1.msra.mxu0 0.0
  %1730 = vmatprep.subr.mxu0 0.0
  %1731 = vmatpush1.msra.mxu0 0.0
  %1732 = vmatprep.subr.mxu0 0.0
  %1733 = vmatpush1.msra.mxu0 0.0
  %1734 = vmatprep.subr.mxu0 0.0
  %1735 = vmatpush1.msra.mxu0 0.0
  %1736 = vmatprep.subr.mxu0 0.0
  %1737 = vmatpush1.msra.mxu0 0.0
  %1738 = vmatprep.mubr.f32.mxu0 0.0
  %1739 = vmatmul.mubr.f32.gmra.mrb[0].mxu0 %v1672
  %v1740 = vpop.f32.mrb[0].mxu0
  %v1741 = vadd.f32 0.0, %v1740
  %v1742 = vpop.f32.mrb[0].mxu0
  %v1743 = vadd.f32 0.0, %v1742
  %1744 = vdwg.mxu0
  %1745 = vmatprep.subr.mxu0 %v405
  %1746 = vmatpush1.msra.mxu0 %v404
  %1747 = vmatprep.subr.mxu0 %v409
  %1748 = vmatpush1.msra.mxu0 %v408
  %1749 = vmatprep.subr.mxu0 %v413
  %1750 = vmatpush1.msra.mxu0 %v412
  %1751 = vmatprep.subr.mxu0 %v417
  %1752 = vmatpush1.msra.mxu0 %v416
  %1753 = vmatprep.subr.mxu0 0.0
  %1754 = vmatpush1.msra.mxu0 0.0
  %1755 = vmatprep.subr.mxu0 0.0
  %1756 = vmatpush1.msra.mxu0 0.0
  %1757 = vmatprep.subr.mxu0 0.0
  %1758 = vmatpush1.msra.mxu0 0.0
  %1759 = vmatprep.subr.mxu0 0.0
  %1760 = vmatpush1.msra.mxu0 0.0
  %1761 = vmatprep.subr.mxu0 0.0
  %1762 = vmatpush1.msra.mxu0 0.0
  %1763 = vmatprep.subr.mxu0 0.0
  %1764 = vmatpush1.msra.mxu0 0.0
  %1765 = vmatprep.subr.mxu0 0.0
  %1766 = vmatpush1.msra.mxu0 0.0
  %1767 = vmatprep.subr.mxu0 0.0
  %1768 = vmatpush1.msra.mxu0 0.0
  %1769 = vmatprep.subr.mxu0 0.0
  %1770 = vmatpush1.msra.mxu0 0.0
  %1771 = vmatprep.subr.mxu0 0.0
  %1772 = vmatpush1.msra.mxu0 0.0
  %1773 = vmatprep.subr.mxu0 0.0
  %1774 = vmatpush1.msra.mxu0 0.0
  %1775 = vmatprep.subr.mxu0 0.0
  %1776 = vmatpush1.msra.mxu0 0.0
  %1777 = vmatprep.subr.mxu0 0.0
  %1778 = vmatpush1.msra.mxu0 0.0
  %1779 = vmatprep.subr.mxu0 0.0
  %1780 = vmatpush1.msra.mxu0 0.0
  %1781 = vmatprep.subr.mxu0 0.0
  %1782 = vmatpush1.msra.mxu0 0.0
  %1783 = vmatprep.subr.mxu0 0.0
  %1784 = vmatpush1.msra.mxu0 0.0
  %1785 = vmatprep.subr.mxu0 0.0
  %1786 = vmatpush1.msra.mxu0 0.0
  %1787 = vmatprep.subr.mxu0 0.0
  %1788 = vmatpush1.msra.mxu0 0.0
  %1789 = vmatprep.subr.mxu0 0.0
  %1790 = vmatpush1.msra.mxu0 0.0
  %1791 = vmatprep.subr.mxu0 0.0
  %1792 = vmatpush1.msra.mxu0 0.0
  %1793 = vmatprep.subr.mxu0 0.0
  %1794 = vmatpush1.msra.mxu0 0.0
  %1795 = vmatprep.subr.mxu0 0.0
  %1796 = vmatpush1.msra.mxu0 0.0
  %1797 = vmatprep.subr.mxu0 0.0
  %1798 = vmatpush1.msra.mxu0 0.0
  %1799 = vmatprep.subr.mxu0 0.0
  %1800 = vmatpush1.msra.mxu0 0.0
  %1801 = vmatprep.subr.mxu0 0.0
  %1802 = vmatpush1.msra.mxu0 0.0
  %1803 = vmatprep.subr.mxu0 0.0
  %1804 = vmatpush1.msra.mxu0 0.0
  %1805 = vmatprep.subr.mxu0 0.0
  %1806 = vmatpush1.msra.mxu0 0.0
  %1807 = vmatprep.subr.mxu0 0.0
  %1808 = vmatpush1.msra.mxu0 0.0
  %1809 = vmatprep.mubr.f32.mxu0 0.0
  %1810 = vmatmul.mubr.f32.gmra.mrb[0].mxu0 %v1672
  %v1811 = vpop.f32.mrb[0].mxu0
  %v1812 = vadd.f32 0.0, %v1811
  %v1813 = vpop.f32.mrb[0].mxu0
  %v1814 = vadd.f32 0.0, %v1813
  %1815 = vdwg.mxu0
  %v1816 = vadd.f32 %v1667, %v1741
  %v1817 = vadd.f32 %v1668, %v1743
  %v1818 = vadd.f32 %v1669, %v1812
  %v1819 = vadd.f32 %v1670, %v1814
  %v1820 = vxor.u32 %v1816, 2147483648
  %v1821 = vxor.u32 %v1817, 2147483648
  %v1822 = vxor.u32 %v1818, 2147483648
  %v1823 = vmul.f32 %v1820, 1.442695
  %v1824 = vpow.pop %v1823
  %v1825 = vmul.f32 %v1821, 1.442695
  %v1826 = vpow.pop %v1825
  %v1827 = vmul.f32 %v1822, 1.442695
  %v1828 = vpow.pop %v1827
  %v1829 = vadd.f32 %v1824, 1.0
  %v1830 = vadd.f32 %v1826, 1.0
  %v1831 = vadd.f32 %v1828, 1.0
  %v1832 = vrcp.pop %v1829
  %v1833 = vmul.f32 1.0, %v1832
  %v1834 = vrcp.pop %v1830
  %v1835 = vmul.f32 1.0, %v1834
  %v1836 = vrcp.pop %v1831
  %v1837 = vmul.f32 1.0, %v1836
  %v1838 = vtanh.pop %v1819
  %v1839 = vmul.f32 %v1835, %v1663
  %v1840 = vmul.f32 %v1833, %v1838
  %v1841 = vadd.f32 %v1839, %v1840
  %v1842 = vtanh.pop %v1841
  %v1843 = vmul.f32 %v1837, %v1842
  %1844 = vst.msk [vmem:[#allocation5 + $0x38] sm:$0xff] %vm424, %v1843
  %1845 = vst.msk [vmem:[#allocation2] sm:$0xff] %vm424, %v1843
  %1846 = vst.msk [vmem:[#allocation3] sm:$0xff] %vm424, %v1841
  %v1847 = vld [vmem:[#allocation5] sm:$0xff]
  %v1848 = vld [vmem:[#allocation5 + $0x8] sm:$0xff]
  %v1849 = vld [vmem:[#allocation5 + $0x10] sm:$0xff]
  %v1850 = vld [vmem:[#allocation5 + $0x18] sm:$0xff]
  %v1851 = vld [vmem:[#allocation5 + $0x20] sm:$0xff]
  %v1852 = vld [vmem:[#allocation5 + $0x28] sm:$0xff]
  %v1853 = vld [vmem:[#allocation5 + $0x30] sm:$0xff]
  %v1854 = vld [vmem:[#allocation5 + $0x38] sm:$0xff]
  %v1855 = vld [vmem:[%s6] sm:$0xff]
  %v1856 = vld [vmem:[%s6 + $0x8] sm:$0xff]
  %v1857 = vld [vmem:[%s6 + $0x10] sm:$0xff]
  %v1858 = vld [vmem:[%s6 + $0x18] sm:$0xff]
  %v1859 = vld [vmem:[%s7] sm:$0x1]
  %v1861 = vlaneseq
  %v1862 = vshrl.u32 %v1861, 7
  %v1863 = vsub.s32 0, %v1862
  %v1864 = vrot.slane %v1859, %v1863
  %v1867 = vsel %vm424, %v1847, 0
  %v1870 = vsel %vm424, %v1848, 0
  %v1873 = vsel %vm424, %v1849, 0
  %v1876 = vsel %vm424, %v1850, 0
  %v1879 = vsel %vm424, %v1851, 0
  %v1882 = vsel %vm424, %v1852, 0
  %v1885 = vsel %vm424, %v1853, 0
  %v1888 = vsel %vm424, %v1854, 0
  %1890 = vmatprep.subr.mxu0 0.0
  %1891 = vmatpush1.msra.mxu0 %v1855
  %1892 = vmatprep.subr.mxu0 0.0
  %1893 = vmatpush1.msra.mxu0 %v1856
  %1894 = vmatprep.subr.mxu0 0.0
  %1895 = vmatpush1.msra.mxu0 %v1857
  %1896 = vmatprep.subr.mxu0 0.0
  %1897 = vmatpush1.msra.mxu0 %v1858
  %1898 = vmatprep.subr.mxu0 0.0
  %1899 = vmatpush1.msra.mxu0 0.0
  %1900 = vmatprep.subr.mxu0 0.0
  %1901 = vmatpush1.msra.mxu0 0.0
  %1902 = vmatprep.subr.mxu0 0.0
  %1903 = vmatpush1.msra.mxu0 0.0
  %1904 = vmatprep.subr.mxu0 0.0
  %1905 = vmatpush1.msra.mxu0 0.0
  %1906 = vmatprep.subr.mxu0 0.0
  %1907 = vmatpush1.msra.mxu0 0.0
  %1908 = vmatprep.subr.mxu0 0.0
  %1909 = vmatpush1.msra.mxu0 0.0
  %1910 = vmatprep.subr.mxu0 0.0
  %1911 = vmatpush1.msra.mxu0 0.0
  %1912 = vmatprep.subr.mxu0 0.0
  %1913 = vmatpush1.msra.mxu0 0.0
  %1914 = vmatprep.subr.mxu0 0.0
  %1915 = vmatpush1.msra.mxu0 0.0
  %1916 = vmatprep.subr.mxu0 0.0
  %1917 = vmatpush1.msra.mxu0 0.0
  %1918 = vmatprep.subr.mxu0 0.0
  %1919 = vmatpush1.msra.mxu0 0.0
  %1920 = vmatprep.subr.mxu0 0.0
  %1921 = vmatpush1.msra.mxu0 0.0
  %1922 = vmatprep.subr.mxu0 0.0
  %1923 = vmatpush1.msra.mxu0 0.0
  %1924 = vmatprep.subr.mxu0 0.0
  %1925 = vmatpush1.msra.mxu0 0.0
  %1926 = vmatprep.subr.mxu0 0.0
  %1927 = vmatpush1.msra.mxu0 0.0
  %1928 = vmatprep.subr.mxu0 0.0
  %1929 = vmatpush1.msra.mxu0 0.0
  %1930 = vmatprep.subr.mxu0 0.0
  %1931 = vmatpush1.msra.mxu0 0.0
  %1932 = vmatprep.subr.mxu0 0.0
  %1933 = vmatpush1.msra.mxu0 0.0
  %1934 = vmatprep.subr.mxu0 0.0
  %1935 = vmatpush1.msra.mxu0 0.0
  %1936 = vmatprep.subr.mxu0 0.0
  %1937 = vmatpush1.msra.mxu0 0.0
  %1938 = vmatprep.subr.mxu0 0.0
  %1939 = vmatpush1.msra.mxu0 0.0
  %1940 = vmatprep.subr.mxu0 0.0
  %1941 = vmatpush1.msra.mxu0 0.0
  %1942 = vmatprep.subr.mxu0 0.0
  %1943 = vmatpush1.msra.mxu0 0.0
  %1944 = vmatprep.subr.mxu0 0.0
  %1945 = vmatpush1.msra.mxu0 0.0
  %1946 = vmatprep.subr.mxu0 0.0
  %1947 = vmatpush1.msra.mxu0 0.0
  %1948 = vmatprep.subr.mxu0 0.0
  %1949 = vmatpush1.msra.mxu0 0.0
  %1950 = vmatprep.subr.mxu0 0.0
  %1951 = vmatpush1.msra.mxu0 0.0
  %1952 = vmatprep.subr.mxu0 0.0
  %1953 = vmatpush1.msra.mxu0 0.0
  %1954 = vmatprep.mubr.f32.mxu0 0.0
  %1955 = vmatmul.mubr.f32.gmra.mrb[0].mxu0 %v1867
  %v1956 = vpop.f32.mrb[0].mxu0
  %v1957 = vadd.f32 %v1864, %v1956
  %v1958 = vpop.f32.mrb[0].mxu0
  %1959 = vmatprep.mubr.f32.mxu0 0.0
  %1960 = vmatmul.mubr.f32.gmra.mrb[0].mxu0 %v1870
  %v1961 = vpop.f32.mrb[0].mxu0
  %v1962 = vadd.f32 %v1864, %v1961
  %v1963 = vpop.f32.mrb[0].mxu0
  %1964 = vmatprep.mubr.f32.mxu0 0.0
  %1965 = vmatmul.mubr.f32.gmra.mrb[0].mxu0 %v1873
  %v1966 = vpop.f32.mrb[0].mxu0
  %v1967 = vadd.f32 %v1864, %v1966
  %v1968 = vpop.f32.mrb[0].mxu0
  %1969 = vmatprep.mubr.f32.mxu0 0.0
  %1970 = vmatmul.mubr.f32.gmra.mrb[0].mxu0 %v1876
  %v1971 = vpop.f32.mrb[0].mxu0
  %v1972 = vadd.f32 %v1864, %v1971
  %v1973 = vpop.f32.mrb[0].mxu0
  %1974 = vmatprep.mubr.f32.mxu0 0.0
  %1975 = vmatmul.mubr.f32.gmra.mrb[0].mxu0 %v1879
  %v1976 = vpop.f32.mrb[0].mxu0
  %v1977 = vadd.f32 %v1864, %v1976
  %v1978 = vpop.f32.mrb[0].mxu0
  %1979 = vmatprep.mubr.f32.mxu0 0.0
  %1980 = vmatmul.mubr.f32.gmra.mrb[0].mxu0 %v1882
  %v1981 = vpop.f32.mrb[0].mxu0
  %v1982 = vadd.f32 %v1864, %v1981
  %v1983 = vpop.f32.mrb[0].mxu0
  %1984 = vmatprep.mubr.f32.mxu0 0.0
  %1985 = vmatmul.mubr.f32.gmra.mrb[0].mxu0 %v1885
  %v1986 = vpop.f32.mrb[0].mxu0
  %v1987 = vadd.f32 %v1864, %v1986
  %v1988 = vpop.f32.mrb[0].mxu0
  %1989 = vmatprep.mubr.f32.mxu0 0.0
  %1990 = vmatmul.mubr.f32.gmra.mrb[0].mxu0 %v1888
  %v1991 = vpop.f32.mrb[0].mxu0
  %v1992 = vadd.f32 %v1864, %v1991
  %v1993 = vpop.f32.mrb[0].mxu0
  %1994 = vdwg.mxu0
  %1995 = vst [vmem:[%s62] sm:$0xff] %v1957
  %1996 = vst [vmem:[%s62 + $0x8] sm:$0xff] %v1962
  %1997 = vst [vmem:[%s62 + $0x10] sm:$0xff] %v1967
  %1998 = vst [vmem:[%s62 + $0x18] sm:$0xff] %v1972
  %1999 = vst [vmem:[%s62 + $0x20] sm:$0xff] %v1977
  %2000 = vst [vmem:[%s62 + $0x28] sm:$0xff] %v1982
  %2001 = vst [vmem:[%s62 + $0x30] sm:$0xff] %v1987
  %2002 = vst [vmem:[%s62 + $0x38] sm:$0xff] %v1992
  %s2003 = sadd.s32 0, 0
  %s2004 = smul.u32 8, %s2003
  %p2005 = scmp.lt.s32.totalorder %s2004, 7
  %s2006 = scalar_select %p2005, %s2004, 7
  %s2007 = smul.addr %s2006, 8
  %s2008 = scalar_lea.vmem %s8, %s2007
  // Predicated region
  $region38: #{lstm_layers_forward.1} parent=0 // pred_check
    _
  $region39: #{lstm_layers_forward.1} parent=0 // pred_check_branch
    %2010 = sbr.rel (0) target = $region41
  $region40: #{lstm_layers_forward.1} parent=0 // pred_region
    %s2011 = sadd.s32 0, 0
    %s2012 = smul.u32 8, %s2011
  $region41: #{lstm_layers_forward.1} parent=0 // pred_fallthru
    _
  // Predicated region
  $region42: #{lstm_layers_forward.1} parent=0 // pred_check
    _
  $region43: #{lstm_layers_forward.1} parent=0 // pred_check_branch
    %2014 = sbr.rel (0) target = $region45
  $region44: #{lstm_layers_forward.1} parent=0 // pred_region
    %s2015 = sadd.s32 0, 0
    %s2016 = smul.u32 8, %s2015
    %p2017 = scmp.lt.s32.totalorder %s2016, 7
    %s2018 = scalar_select %p2017, %s2016, 7
    %s2019 = smul.addr %s2018, 8
    %s2020 = scalar_lea.vmem %s8, %s2019
  $region45: #{lstm_layers_forward.1} parent=0 // pred_fallthru
    _

</llo_original>
